<compile_context>
chip_gen: v6e
topology: v6e:2x2x1
jax: 0.10.0
libtpu: 0.0.40
codegen_flags: <defaults>
</compile_context>

<pallas_src>
import functools

import jax
import jax.numpy as jnp
from jax.experimental import pallas as pl
from jax.experimental.pallas import tpu as pltpu


def _round_up(x, m):
    return (x + m - 1) // m * m


def _fused_concat64_2_kernel(xy_ref, w1_ref, b1_ref, w2_ref, b2_ref, mask_ref,
                             o_ref, *, Nb, Wp2, Mseg, Mout):
    """One grid step = Nb batch elements of the fused forward pass.

    xy_ref   : (Nb, 2C, Lin)  f32   cat([x, y], C), zero-padded by 2 per spatial
                                    side, flattened row-major over (H+4, W+4)
    w1_ref   : (2C, 9*2C)     bf16  fused layer-1 weight  [conv_a ; conv_b|conv_b]
    b1_ref   : (2C, 1)        f32   fused layer-1 bias    [b_a ; b_b]
    w2_ref   : (C, 9*2C)      bf16  conv_c weight (im2col-flattened)
    b2_ref   : (C, 1)         f32
    mask_ref : (2C, Nb*Mseg)  f32   1.0 exactly on interior once-padded positions
    o_ref    : (Nb, C, Mout)  f32   lane-dense output (junk cols stripped outside)
    """
    tap_offsets = [kh * Wp2 + kw for kh in range(3) for kw in range(3)]

    def im2col(get_segment, ncols):
        # Rows ordered (kh, kw, cin) to match the weight column ordering.
        # Per tap: lane-concat the Nb batch segments; then sublane-stack the 9
        # taps (each block is a whole number of f32 vregs tall -> cheap stack).
        rows = []
        for off in tap_offsets:
            segs = [get_segment(b, off, ncols) for b in range(Nb)]
            rows.append(segs[0] if Nb == 1 else jnp.concatenate(segs, axis=-1))
        return jnp.concatenate(rows, axis=0)              # (9*2C, Nb*ncols) f32

    # ---- Layer 1: fused [conv_a(cat(x, y)) ; conv_b(x + y)]  (2C -> 2C) ----
    # Taps are pure lane-offset slices of the pre-padded input block.
    patch1 = im2col(lambda b, off, n: xy_ref[b, :, off:off + n], Mseg)
    mid = jnp.dot(w1_ref[...], patch1.astype(w1_ref.dtype),
                  preferred_element_type=jnp.float32)     # (2C, Nb*Mseg) f32
    # Bias then mask: interior positions keep (conv + bias); the 1-pixel border,
    # the junk columns and the tail become exact zeros, so `mid` IS the once-
    # padded cat([out1, out2]) laid out with row stride Wp2 per batch segment.
    mid = (mid + b1_ref[...]) * mask_ref[...]

    # ---- Layer 2: conv_c on cat([out1, out2])  (2C -> C) ----
    # Taps are lane-offset slices of `mid` within each batch segment (Mseg was
    # sized so the furthest tap slice never crosses a segment boundary).
    patch2 = im2col(lambda b, off, n: mid[:, b * Mseg + off:b * Mseg + off + n],
                    Mout)
    out = jnp.dot(w2_ref[...], patch2.astype(w2_ref.dtype),
                  preferred_element_type=jnp.float32) + b2_ref[...]  # (C, Nb*Mout)

    for b in range(Nb):   # 128-aligned, lane-dense, unmasked stores
        o_ref[b] = out[:, b * Mout:(b + 1) * Mout].astype(o_ref.dtype)


def concat64_2_forward(params, x, y, *, batch_block=None):
    """Fused forward pass. Inputs and output are NCHW, like the PyTorch module."""
    N, C, H, W = x.shape
    assert y.shape == x.shape
    C2 = 2 * C
    Hp2, Wp2 = H + 4, W + 4            # doubly-padded spatial extents
    Hp = H + 2                         # once-padded rows (layer-1 output rows)
    M1 = Hp * Wp2                      # layer-1 useful domain (once-padded, stride Wp2)
    M2 = H * Wp2                       # layer-2 useful domain (output rows, stride Wp2)
    Mout = _round_up(M2, 128)          # lane-dense per-batch output width
    # Per-batch layer-1 compute width: big enough that every layer-2 tap slice
    # (offset <= 2*Wp2 + 2, length Mout) stays inside its own batch segment.
    Mseg = _round_up(Mout + 2 * Wp2 + 2, 128)
    # Padded input lane width: every layer-1 tap slice (offset <= 2*Wp2 + 2,
    # length Mseg) must stay in bounds; this is always >= Hp2*Wp2.
    Lin = _round_up(Mseg + 2 * Wp2 + 2, 128)

    if batch_block is None:
        batch_block = 2 if (N % 2 == 0 and N >= 4) else 1
    Nb = batch_block
    Npad = _round_up(N, Nb)

    wa, ba = params["concat_conv"]      # (C, 2C, 3, 3), (C,)
    wb, bb = params["add_conv"]         # (C,  C, 3, 3), (C,)
    wc, bc = params["concat_conv2"]     # (C, 2C, 3, 3), (C,)

    # Exact fusion: conv_b(x + y) == conv over cat([x, y]) with weight [w_b | w_b]
    # stacked on the input-channel axis; bias applied once.
    w1 = jnp.concatenate([wa, jnp.concatenate([wb, wb], axis=1)], axis=0)
    b1 = jnp.concatenate([ba, bb], axis=0)

    def to_matmul(w):
        # (O, I, 3, 3) -> (O, 9*I), columns ordered (kh, kw, cin) to match the
        # kernel's im2col row ordering.  bf16 operands for the MXU.
        o, i = w.shape[0], w.shape[1]
        return jnp.transpose(w, (0, 2, 3, 1)).reshape(o, 9 * i).astype(jnp.bfloat16)

    w1m = to_matmul(w1)                                    # (2C, 9*2C) bf16
    w2m = to_matmul(wc)                                    # (C,  9*2C) bf16
    b1c = b1.reshape(C2, 1).astype(jnp.float32)
    b2c = bc.reshape(C, 1).astype(jnp.float32)

    # cat([x, y], C), zero-padded by 2 per spatial side, flattened row-major over
    # (H+4, W+4), lane-padded to Lin: exactly the layout the kernel slices, so the
    # BlockSpec DMA replaces v1's per-row scatter loop and img1 scratch.
    xy = jnp.concatenate([x, y], axis=1).astype(jnp.float32)       # (N, 2C, H, W)
    xy = jnp.pad(xy, ((0, Npad - N), (0, 0), (2, 2), (2, 2)))      # (Npad, 2C, Hp2, Wp2)
    xy = xy.reshape(Npad, C2, Hp2 * Wp2)
    xy = jnp.pad(xy, ((0, 0), (0, 0), (0, Lin - Hp2 * Wp2)))       # (Npad, 2C, Lin)

    # Mask over one batch segment of the layer-1 compute domain (Mseg lanes laid
    # out with row stride Wp2): 1.0 exactly on interior once-padded positions
    # (1 <= r <= H, 1 <= c <= W); the 1-pixel border, junk columns c > W and the
    # tail are 0.  Pre-broadcast to 2C rows and pre-tiled over Nb so the kernel
    # does a plain elementwise multiply (no per-step broadcast_in_dim).
    j = jnp.arange(Mseg, dtype=jnp.int32)
    r, c = j // Wp2, j % Wp2
    m = ((r >= 1) & (r <= H) & (c >= 1) & (c <= W)).astype(jnp.float32)
    mask = jnp.broadcast_to(jnp.tile(m, (Nb,)), (C2, Nb * Mseg))

    kernel = functools.partial(_fused_concat64_2_kernel,
                               Nb=Nb, Wp2=Wp2, Mseg=Mseg, Mout=Mout)

    out_pad = pl.pallas_call(
        kernel,
        out_shape=jax.ShapeDtypeStruct((Npad, C, Mout), jnp.float32),
        grid_spec=pltpu.PrefetchScalarGridSpec(
            num_scalar_prefetch=0,
            grid=(Npad // Nb,),
            in_specs=[
                pl.BlockSpec((Nb, C2, Lin), lambda g: (g, 0, 0)),   # padded cat([x,y])
                pl.BlockSpec((C2, 9 * C2), lambda g: (0, 0)),       # w1 (resident)
                pl.BlockSpec((C2, 1), lambda g: (0, 0)),            # b1
                pl.BlockSpec((C, 9 * C2), lambda g: (0, 0)),        # w2 (resident)
                pl.BlockSpec((C, 1), lambda g: (0, 0)),             # b2
                pl.BlockSpec((C2, Nb * Mseg), lambda g: (0, 0)),    # mask (resident)
            ],
            out_specs=pl.BlockSpec((Nb, C, Mout), lambda g: (g, 0, 0)),
        ),
        compiler_params=pltpu.CompilerParams(
            dimension_semantics=("parallel",),   # batch blocks split across TCs on v7x
        ),
    )(xy, w1m, b1c, w2m, b2c, mask)

    # Drop batch padding, the junk columns (row stride is Wp2) and lane padding.
    out = out_pad[:N, :, :M2].reshape(N, C, H, Wp2)[:, :, :, :W]
    return out.astype(x.dtype)


def init_params(key, in_channel):
    """PyTorch nn.Conv2d-style init; weights stored in OIHW like PyTorch."""
    C = in_channel
    ks = jax.random.split(key, 6)

    def conv_init(kw, kb, cin, cout):
        bound = 1.0 / (cin * 9) ** 0.5
        w = jax.random.uniform(kw, (cout, cin, 3, 3), jnp.float32, -bound, bound)
        b = jax.random.uniform(kb, (cout,), jnp.float32, -bound, bound)
        return w, b

    return {
        "concat_conv": conv_init(ks[0], ks[1], 2 * C, C),
        "add_conv": conv_init(ks[2], ks[3], C, C),
        "concat_conv2": conv_init(ks[4], ks[5], 2 * C, C),
    }


def _reference_forward(params, x, y):
    """Pure-XLA reference implementing the PyTorch module verbatim."""
    def conv(inp, w, b):
        out = jax.lax.conv_general_dilated(
            inp, w, window_strides=(1, 1), padding=((1, 1), (1, 1)),
            dimension_numbers=("NCHW", "OIHW", "NCHW"))
        return out + b.reshape(1, -1, 1, 1)

    wa, ba = params["concat_conv"]
    wb, bb = params["add_conv"]
    wc, bc = params["concat_conv2"]
    out1 = conv(jnp.concatenate([x, y], axis=1), wa, ba)
    out2 = conv(x + y, wb, bb)
    return conv(jnp.concatenate([out1, out2], axis=1), wc, bc)


if __name__ == "__main__":
    # Small demo shapes; N=4 with batch_block=2 exercises batch blocking while
    # keeping >= 2 grid steps (both v7x TensorCores get work).
    N, C, H, W = 4, 4, 16, 16
    key = jax.random.PRNGKey(0)
    kx, ky, kp = jax.random.split(key, 3)

    x = jax.random.normal(kx, (N, C, H, W), dtype=jnp.float32)
    y = jax.random.normal(ky, (N, C, H, W), dtype=jnp.float32)
    params = init_params(kp, C)

    fwd = jax.jit(functools.partial(concat64_2_forward, batch_block=2))
    out = fwd(params, x, y)
    jax.block_until_ready(out)
    assert out.shape == (N, C, H, W)

    # Check against a plain-XLA reference (tolerance covers bf16-operand MXU
    # matmuls with f32 accumulation vs XLA's default conv precision).
    ref = _reference_forward(params, x, y)
    max_err = float(jnp.max(jnp.abs(out - ref)))
    assert max_err < 5e-2, f"mismatch vs reference: {max_err}"

    print("KERNEL_OK")
</pallas_src>

<mosaic_0001>
module attributes {stable_mosaic.version = 11 : i64} {
  func.func @_fused_concat64_2_kernel(%arg0: i32, %arg1: memref<2x8x640xf32, #tpu.memory_space<vmem>>, %arg2: memref<8x72xbf16, #tpu.memory_space<vmem>>, %arg3: memref<8x1xf32, #tpu.memory_space<vmem>>, %arg4: memref<4x72xbf16, #tpu.memory_space<vmem>>, %arg5: memref<4x1xf32, #tpu.memory_space<vmem>>, %arg6: memref<8x1024xf32, #tpu.memory_space<vmem>>, %arg7: memref<2x4x384xf32, #tpu.memory_space<vmem>>) attributes {dimension_semantics = [#tpu.dimension_semantics<parallel>], iteration_bounds = array<i64: 2>, scalar_prefetch = 0 : i64, scratch_operands = 0 : i64, tpu.core_type = #tpu.core_type<tc>, window_params = [{transform_indices = @transform_0, window_bounds = array<i64: 2, 8, 640>}, {pipeline_mode = #tpu.pipeline_mode<synchronous>, transform_indices = @transform_1, window_bounds = array<i64: 8, 72>}, {pipeline_mode = #tpu.pipeline_mode<synchronous>, transform_indices = @transform_2, window_bounds = array<i64: 8, 1>}, {pipeline_mode = #tpu.pipeline_mode<synchronous>, transform_indices = @transform_3, window_bounds = array<i64: 4, 72>}, {pipeline_mode = #tpu.pipeline_mode<synchronous>, transform_indices = @transform_4, window_bounds = array<i64: 4, 1>}, {pipeline_mode = #tpu.pipeline_mode<synchronous>, transform_indices = @transform_5, window_bounds = array<i64: 8, 1024>}, {transform_indices = @transform_6, window_bounds = array<i64: 2, 4, 384>}]} {
    %c0 = arith.constant 0 : index
    %c0_0 = arith.constant 0 : index
    %c0_1 = arith.constant 0 : index
    %0 = vector.load %arg1[%c0, %c0_0, %c0_1] : memref<2x8x640xf32, #tpu.memory_space<vmem>>, vector<1x8x512xf32>
    %1 = vector.shape_cast %0 : vector<1x8x512xf32> to vector<8x512xf32>
    %c1 = arith.constant 1 : index
    %c0_2 = arith.constant 0 : index
    %c0_3 = arith.constant 0 : index
    %2 = vector.load %arg1[%c1, %c0_2, %c0_3] : memref<2x8x640xf32, #tpu.memory_space<vmem>>, vector<1x8x512xf32>
    %3 = vector.shape_cast %2 : vector<1x8x512xf32> to vector<8x512xf32>
    %4 = tpu.concatenate %1, %3 in 1 : vector<8x512xf32>, vector<8x512xf32> -> vector<8x1024xf32>
    %c0_4 = arith.constant 0 : index
    %c0_5 = arith.constant 0 : index
    %c1_6 = arith.constant 1 : index
    %5 = vector.load %arg1[%c0_4, %c0_5, %c1_6] : memref<2x8x640xf32, #tpu.memory_space<vmem>>, vector<1x8x512xf32>
    %6 = vector.shape_cast %5 : vector<1x8x512xf32> to vector<8x512xf32>
    %c1_7 = arith.constant 1 : index
    %c0_8 = arith.constant 0 : index
    %c1_9 = arith.constant 1 : index
    %7 = vector.load %arg1[%c1_7, %c0_8, %c1_9] : memref<2x8x640xf32, #tpu.memory_space<vmem>>, vector<1x8x512xf32>
    %8 = vector.shape_cast %7 : vector<1x8x512xf32> to vector<8x512xf32>
    %9 = tpu.concatenate %6, %8 in 1 : vector<8x512xf32>, vector<8x512xf32> -> vector<8x1024xf32>
    %c0_10 = arith.constant 0 : index
    %c0_11 = arith.constant 0 : index
    %c2 = arith.constant 2 : index
    %10 = vector.load %arg1[%c0_10, %c0_11, %c2] : memref<2x8x640xf32, #tpu.memory_space<vmem>>, vector<1x8x512xf32>
    %11 = vector.shape_cast %10 : vector<1x8x512xf32> to vector<8x512xf32>
    %c1_12 = arith.constant 1 : index
    %c0_13 = arith.constant 0 : index
    %c2_14 = arith.constant 2 : index
    %12 = vector.load %arg1[%c1_12, %c0_13, %c2_14] : memref<2x8x640xf32, #tpu.memory_space<vmem>>, vector<1x8x512xf32>
    %13 = vector.shape_cast %12 : vector<1x8x512xf32> to vector<8x512xf32>
    %14 = tpu.concatenate %11, %13 in 1 : vector<8x512xf32>, vector<8x512xf32> -> vector<8x1024xf32>
    %c0_15 = arith.constant 0 : index
    %c0_16 = arith.constant 0 : index
    %c20 = arith.constant 20 : index
    %15 = vector.load %arg1[%c0_15, %c0_16, %c20] : memref<2x8x640xf32, #tpu.memory_space<vmem>>, vector<1x8x512xf32>
    %16 = vector.shape_cast %15 : vector<1x8x512xf32> to vector<8x512xf32>
    %c1_17 = arith.constant 1 : index
    %c0_18 = arith.constant 0 : index
    %c20_19 = arith.constant 20 : index
    %17 = vector.load %arg1[%c1_17, %c0_18, %c20_19] : memref<2x8x640xf32, #tpu.memory_space<vmem>>, vector<1x8x512xf32>
    %18 = vector.shape_cast %17 : vector<1x8x512xf32> to vector<8x512xf32>
    %19 = tpu.concatenate %16, %18 in 1 : vector<8x512xf32>, vector<8x512xf32> -> vector<8x1024xf32>
    %c0_20 = arith.constant 0 : index
    %c0_21 = arith.constant 0 : index
    %c21 = arith.constant 21 : index
    %20 = vector.load %arg1[%c0_20, %c0_21, %c21] : memref<2x8x640xf32, #tpu.memory_space<vmem>>, vector<1x8x512xf32>
    %21 = vector.shape_cast %20 : vector<1x8x512xf32> to vector<8x512xf32>
    %c1_22 = arith.constant 1 : index
    %c0_23 = arith.constant 0 : index
    %c21_24 = arith.constant 21 : index
    %22 = vector.load %arg1[%c1_22, %c0_23, %c21_24] : memref<2x8x640xf32, #tpu.memory_space<vmem>>, vector<1x8x512xf32>
    %23 = vector.shape_cast %22 : vector<1x8x512xf32> to vector<8x512xf32>
    %24 = tpu.concatenate %21, %23 in 1 : vector<8x512xf32>, vector<8x512xf32> -> vector<8x1024xf32>
    %c0_25 = arith.constant 0 : index
    %c0_26 = arith.constant 0 : index
    %c22 = arith.constant 22 : index
    %25 = vector.load %arg1[%c0_25, %c0_26, %c22] : memref<2x8x640xf32, #tpu.memory_space<vmem>>, vector<1x8x512xf32>
    %26 = vector.shape_cast %25 : vector<1x8x512xf32> to vector<8x512xf32>
    %c1_27 = arith.constant 1 : index
    %c0_28 = arith.constant 0 : index
    %c22_29 = arith.constant 22 : index
    %27 = vector.load %arg1[%c1_27, %c0_28, %c22_29] : memref<2x8x640xf32, #tpu.memory_space<vmem>>, vector<1x8x512xf32>
    %28 = vector.shape_cast %27 : vector<1x8x512xf32> to vector<8x512xf32>
    %29 = tpu.concatenate %26, %28 in 1 : vector<8x512xf32>, vector<8x512xf32> -> vector<8x1024xf32>
    %c0_30 = arith.constant 0 : index
    %c0_31 = arith.constant 0 : index
    %c40 = arith.constant 40 : index
    %30 = vector.load %arg1[%c0_30, %c0_31, %c40] : memref<2x8x640xf32, #tpu.memory_space<vmem>>, vector<1x8x512xf32>
    %31 = vector.shape_cast %30 : vector<1x8x512xf32> to vector<8x512xf32>
    %c1_32 = arith.constant 1 : index
    %c0_33 = arith.constant 0 : index
    %c40_34 = arith.constant 40 : index
    %32 = vector.load %arg1[%c1_32, %c0_33, %c40_34] : memref<2x8x640xf32, #tpu.memory_space<vmem>>, vector<1x8x512xf32>
    %33 = vector.shape_cast %32 : vector<1x8x512xf32> to vector<8x512xf32>
    %34 = tpu.concatenate %31, %33 in 1 : vector<8x512xf32>, vector<8x512xf32> -> vector<8x1024xf32>
    %c0_35 = arith.constant 0 : index
    %c0_36 = arith.constant 0 : index
    %c41 = arith.constant 41 : index
    %35 = vector.load %arg1[%c0_35, %c0_36, %c41] : memref<2x8x640xf32, #tpu.memory_space<vmem>>, vector<1x8x512xf32>
    %36 = vector.shape_cast %35 : vector<1x8x512xf32> to vector<8x512xf32>
    %c1_37 = arith.constant 1 : index
    %c0_38 = arith.constant 0 : index
    %c41_39 = arith.constant 41 : index
    %37 = vector.load %arg1[%c1_37, %c0_38, %c41_39] : memref<2x8x640xf32, #tpu.memory_space<vmem>>, vector<1x8x512xf32>
    %38 = vector.shape_cast %37 : vector<1x8x512xf32> to vector<8x512xf32>
    %39 = tpu.concatenate %36, %38 in 1 : vector<8x512xf32>, vector<8x512xf32> -> vector<8x1024xf32>
    %c0_40 = arith.constant 0 : index
    %c0_41 = arith.constant 0 : index
    %c42 = arith.constant 42 : index
    %40 = vector.load %arg1[%c0_40, %c0_41, %c42] : memref<2x8x640xf32, #tpu.memory_space<vmem>>, vector<1x8x512xf32>
    %41 = vector.shape_cast %40 : vector<1x8x512xf32> to vector<8x512xf32>
    %c1_42 = arith.constant 1 : index
    %c0_43 = arith.constant 0 : index
    %c42_44 = arith.constant 42 : index
    %42 = vector.load %arg1[%c1_42, %c0_43, %c42_44] : memref<2x8x640xf32, #tpu.memory_space<vmem>>, vector<1x8x512xf32>
    %43 = vector.shape_cast %42 : vector<1x8x512xf32> to vector<8x512xf32>
    %44 = tpu.concatenate %41, %43 in 1 : vector<8x512xf32>, vector<8x512xf32> -> vector<8x1024xf32>
    %45 = tpu.concatenate %4, %9, %14, %19, %24, %29, %34, %39, %44 in 0 : vector<8x1024xf32>, vector<8x1024xf32>, vector<8x1024xf32>, vector<8x1024xf32>, vector<8x1024xf32>, vector<8x1024xf32>, vector<8x1024xf32>, vector<8x1024xf32>, vector<8x1024xf32> -> vector<72x1024xf32>
    %c0_45 = arith.constant 0 : index
    %c0_46 = arith.constant 0 : index
    %46 = vector.load %arg2[%c0_45, %c0_46] : memref<8x72xbf16, #tpu.memory_space<vmem>>, vector<8x72xbf16>
    %47 = arith.truncf %45 : vector<72x1024xf32> to vector<72x1024xbf16>
    %cst = arith.constant dense<0.000000e+00> : vector<8x1024xf32>
    %48 = tpu.matmul %46, %47, %cst {dimension_numbers = #tpu.dot_dimension_numbers<[1], [0], [0], [1], [0, 0, 1, 1], [], []>} : vector<8x72xbf16>, vector<72x1024xbf16>, vector<8x1024xf32> -> vector<8x1024xf32>
    %c0_47 = arith.constant 0 : index
    %c0_48 = arith.constant 0 : index
    %49 = vector.load %arg3[%c0_47, %c0_48] : memref<8x1xf32, #tpu.memory_space<vmem>>, vector<8x1xf32>
    %50 = vector.broadcast %49 : vector<8x1xf32> to vector<8x1024xf32>
    %51 = arith.addf %48, %50 : vector<8x1024xf32>
    %c0_49 = arith.constant 0 : index
    %c0_50 = arith.constant 0 : index
    %52 = vector.load %arg6[%c0_49, %c0_50] : memref<8x1024xf32, #tpu.memory_space<vmem>>, vector<8x1024xf32>
    %53 = arith.mulf %51, %52 : vector<8x1024xf32>
    %54 = vector.extract_strided_slice %53 {offsets = [0, 0], sizes = [8, 384], strides = [1, 1]} : vector<8x1024xf32> to vector<8x384xf32>
    %55 = vector.extract_strided_slice %53 {offsets = [0, 512], sizes = [8, 384], strides = [1, 1]} : vector<8x1024xf32> to vector<8x384xf32>
    %56 = tpu.concatenate %54, %55 in 1 : vector<8x384xf32>, vector<8x384xf32> -> vector<8x768xf32>
    %57 = vector.extract_strided_slice %53 {offsets = [0, 1], sizes = [8, 384], strides = [1, 1]} : vector<8x1024xf32> to vector<8x384xf32>
    %58 = vector.extract_strided_slice %53 {offsets = [0, 513], sizes = [8, 384], strides = [1, 1]} : vector<8x1024xf32> to vector<8x384xf32>
    %59 = tpu.concatenate %57, %58 in 1 : vector<8x384xf32>, vector<8x384xf32> -> vector<8x768xf32>
    %60 = vector.extract_strided_slice %53 {offsets = [0, 2], sizes = [8, 384], strides = [1, 1]} : vector<8x1024xf32> to vector<8x384xf32>
    %61 = vector.extract_strided_slice %53 {offsets = [0, 514], sizes = [8, 384], strides = [1, 1]} : vector<8x1024xf32> to vector<8x384xf32>
    %62 = tpu.concatenate %60, %61 in 1 : vector<8x384xf32>, vector<8x384xf32> -> vector<8x768xf32>
    %63 = vector.extract_strided_slice %53 {offsets = [0, 20], sizes = [8, 384], strides = [1, 1]} : vector<8x1024xf32> to vector<8x384xf32>
    %64 = vector.extract_strided_slice %53 {offsets = [0, 532], sizes = [8, 384], strides = [1, 1]} : vector<8x1024xf32> to vector<8x384xf32>
    %65 = tpu.concatenate %63, %64 in 1 : vector<8x384xf32>, vector<8x384xf32> -> vector<8x768xf32>
    %66 = vector.extract_strided_slice %53 {offsets = [0, 21], sizes = [8, 384], strides = [1, 1]} : vector<8x1024xf32> to vector<8x384xf32>
    %67 = vector.extract_strided_slice %53 {offsets = [0, 533], sizes = [8, 384], strides = [1, 1]} : vector<8x1024xf32> to vector<8x384xf32>
    %68 = tpu.concatenate %66, %67 in 1 : vector<8x384xf32>, vector<8x384xf32> -> vector<8x768xf32>
    %69 = vector.extract_strided_slice %53 {offsets = [0, 22], sizes = [8, 384], strides = [1, 1]} : vector<8x1024xf32> to vector<8x384xf32>
    %70 = vector.extract_strided_slice %53 {offsets = [0, 534], sizes = [8, 384], strides = [1, 1]} : vector<8x1024xf32> to vector<8x384xf32>
    %71 = tpu.concatenate %69, %70 in 1 : vector<8x384xf32>, vector<8x384xf32> -> vector<8x768xf32>
    %72 = vector.extract_strided_slice %53 {offsets = [0, 40], sizes = [8, 384], strides = [1, 1]} : vector<8x1024xf32> to vector<8x384xf32>
    %73 = vector.extract_strided_slice %53 {offsets = [0, 552], sizes = [8, 384], strides = [1, 1]} : vector<8x1024xf32> to vector<8x384xf32>
    %74 = tpu.concatenate %72, %73 in 1 : vector<8x384xf32>, vector<8x384xf32> -> vector<8x768xf32>
    %75 = vector.extract_strided_slice %53 {offsets = [0, 41], sizes = [8, 384], strides = [1, 1]} : vector<8x1024xf32> to vector<8x384xf32>
    %76 = vector.extract_strided_slice %53 {offsets = [0, 553], sizes = [8, 384], strides = [1, 1]} : vector<8x1024xf32> to vector<8x384xf32>
    %77 = tpu.concatenate %75, %76 in 1 : vector<8x384xf32>, vector<8x384xf32> -> vector<8x768xf32>
    %78 = vector.extract_strided_slice %53 {offsets = [0, 42], sizes = [8, 384], strides = [1, 1]} : vector<8x1024xf32> to vector<8x384xf32>
    %79 = vector.extract_strided_slice %53 {offsets = [0, 554], sizes = [8, 384], strides = [1, 1]} : vector<8x1024xf32> to vector<8x384xf32>
    %80 = tpu.concatenate %78, %79 in 1 : vector<8x384xf32>, vector<8x384xf32> -> vector<8x768xf32>
    %81 = tpu.concatenate %56, %59, %62, %65, %68, %71, %74, %77, %80 in 0 : vector<8x768xf32>, vector<8x768xf32>, vector<8x768xf32>, vector<8x768xf32>, vector<8x768xf32>, vector<8x768xf32>, vector<8x768xf32>, vector<8x768xf32>, vector<8x768xf32> -> vector<72x768xf32>
    %c0_51 = arith.constant 0 : index
    %c0_52 = arith.constant 0 : index
    %82 = vector.load %arg4[%c0_51, %c0_52] : memref<4x72xbf16, #tpu.memory_space<vmem>>, vector<4x72xbf16>
    %83 = arith.truncf %81 : vector<72x768xf32> to vector<72x768xbf16>
    %cst_53 = arith.constant dense<0.000000e+00> : vector<4x768xf32>
    %84 = tpu.matmul %82, %83, %cst_53 {dimension_numbers = #tpu.dot_dimension_numbers<[1], [0], [0], [1], [0, 0, 1, 1], [], []>} : vector<4x72xbf16>, vector<72x768xbf16>, vector<4x768xf32> -> vector<4x768xf32>
    %c0_54 = arith.constant 0 : index
    %c0_55 = arith.constant 0 : index
    %85 = vector.load %arg5[%c0_54, %c0_55] : memref<4x1xf32, #tpu.memory_space<vmem>>, vector<4x1xf32>
    %86 = vector.broadcast %85 : vector<4x1xf32> to vector<4x768xf32>
    %87 = arith.addf %84, %86 : vector<4x768xf32>
    %88 = vector.extract_strided_slice %87 {offsets = [0, 0], sizes = [4, 384], strides = [1, 1]} : vector<4x768xf32> to vector<4x384xf32>
    %c0_56 = arith.constant 0 : index
    %c0_57 = arith.constant 0 : index
    %c0_58 = arith.constant 0 : index
    %89 = vector.load %arg7[%c0_56, %c0_57, %c0_58] : memref<2x4x384xf32, #tpu.memory_space<vmem>>, vector<1x4x384xf32>
    %90 = vector.shape_cast %89 : vector<1x4x384xf32> to vector<4x384xf32>
    %91 = vector.shape_cast %88 : vector<4x384xf32> to vector<1x4x384xf32>
    tpu.vector_store %arg7[%c0_56, %c0_57, %c0_58], %91 {strides = array<i32>} : memref<2x4x384xf32, #tpu.memory_space<vmem>>, vector<1x4x384xf32>,
    %92 = vector.extract_strided_slice %87 {offsets = [0, 384], sizes = [4, 384], strides = [1, 1]} : vector<4x768xf32> to vector<4x384xf32>
    %c1_59 = arith.constant 1 : index
    %c0_60 = arith.constant 0 : index
    %c0_61 = arith.constant 0 : index
    %93 = vector.load %arg7[%c1_59, %c0_60, %c0_61] : memref<2x4x384xf32, #tpu.memory_space<vmem>>, vector<1x4x384xf32>
    %94 = vector.shape_cast %93 : vector<1x4x384xf32> to vector<4x384xf32>
    %95 = vector.shape_cast %92 : vector<4x384xf32> to vector<1x4x384xf32>
    tpu.vector_store %arg7[%c1_59, %c0_60, %c0_61], %95 {strides = array<i32>} : memref<2x4x384xf32, #tpu.memory_space<vmem>>, vector<1x4x384xf32>,
    return
  }
  func.func @transform_0(%arg0: i32) -> (i32, i32, i32) {
    %c0_i32 = arith.constant 0 : i32
    %c0_i32_0 = arith.constant 0 : i32
    %c0_i32_1 = arith.constant 0 : i32
    return %arg0, %c0_i32, %c0_i32_0 : i32, i32, i32
  }
  func.func @transform_1(%arg0: i32) -> (i32, i32) {
    %c0_i32 = arith.constant 0 : i32
    %c0_i32_0 = arith.constant 0 : i32
    %c0_i32_1 = arith.constant 0 : i32
    return %c0_i32, %c0_i32_0 : i32, i32
  }
  func.func @transform_2(%arg0: i32) -> (i32, i32) {
    %c0_i32 = arith.constant 0 : i32
    %c0_i32_0 = arith.constant 0 : i32
    %c0_i32_1 = arith.constant 0 : i32
    return %c0_i32, %c0_i32_0 : i32, i32
  }
  func.func @transform_3(%arg0: i32) -> (i32, i32) {
    %c0_i32 = arith.constant 0 : i32
    %c0_i32_0 = arith.constant 0 : i32
    %c0_i32_1 = arith.constant 0 : i32
    return %c0_i32, %c0_i32_0 : i32, i32
  }
  func.func @transform_4(%arg0: i32) -> (i32, i32) {
    %c0_i32 = arith.constant 0 : i32
    %c0_i32_0 = arith.constant 0 : i32
    %c0_i32_1 = arith.constant 0 : i32
    return %c0_i32, %c0_i32_0 : i32, i32
  }
  func.func @transform_5(%arg0: i32) -> (i32, i32) {
    %c0_i32 = arith.constant 0 : i32
    %c0_i32_0 = arith.constant 0 : i32
    %c0_i32_1 = arith.constant 0 : i32
    return %c0_i32, %c0_i32_0 : i32, i32
  }
  func.func @transform_6(%arg0: i32) -> (i32, i32, i32) {
    %c0_i32 = arith.constant 0 : i32
    %c0_i32_0 = arith.constant 0 : i32
    %c0_i32_1 = arith.constant 0 : i32
    return %arg0, %c0_i32, %c0_i32_0 : i32, i32, i32
  }
}

</mosaic_0001>

<llo_original>
// kernel: concat64_2_forward.1
$region0: #{concat64_2_forward.1}
  #allocation0 [shape = 'u32[]', space=smem, size = 0x4, offset = 0x4, fixed_abs, tag = 'smem constant byte address 0x4 - core index']
  #allocation1 [shape = 'u32[144,128]{1,0:T(1,128)}', space=vmem, size = 0x12000, scoped, tag = 'internal scratch']
  %s0 = inlined_call_operand.vmem [shape: f32[4,8,640], index: 0, kind: input, shape index: {}]
  %s1 = inlined_call_operand.vmem [shape: bf16[8,72], index: 1, kind: input, shape index: {}]
  %s2 = inlined_call_operand.vmem [shape: f32[8,1], index: 2, kind: input, shape index: {}]
  %s3 = inlined_call_operand.vmem [shape: bf16[4,72], index: 3, kind: input, shape index: {}]
  %s4 = inlined_call_operand.vmem [shape: f32[4,1], index: 4, kind: input, shape index: {}]
  %s5 = inlined_call_operand.vmem [shape: f32[8,1024], index: 5, kind: input, shape index: {}]
  %s6 = inlined_call_operand.vmem [shape: f32[4,4,384], index: 6, kind: output, shape index: {}]
  %s7 = sld [smem:[#allocation0]]
  $region57: #{concat64_2_forward.1} parent=0
    _
  %s9 = ssub.s32 1, %s7
  %s10 = scalar_select 0, %s9, %s7
  loop: start=0, step=1, limit=4
  $region2: #{concat64_2_forward.1} parent=0 // loop_pre_header
    _
  $region3: #{concat64_2_forward.1} parent=0 // loop_header
    %s12 = sphi 0, %s16
    %p13 = scmp.ge.s32.totalorder %s12, 4
    %s22 = sphi 0, %s24
    %s25 = sphi 0, %s22
    %s26 = sphi 0, %s25
    %s42 = sphi 0, %s26
    %s46 = sphi 0, %s46
    %s48 = sphi 0, %s46
    %s49 = sphi 0, %s48
    %s63 = sphi 0, %s49
    %s67 = sphi 0, %s67
    %s69 = sphi 0, %s67
    %s70 = sphi 0, %s69
    %s84 = sphi 0, %s70
    %s88 = sphi 0, %s88
    %s90 = sphi 0, %s88
    %s91 = sphi 0, %s90
    %s105 = sphi 0, %s91
    %s109 = sphi 0, %s109
    %s111 = sphi 0, %s109
    %s112 = sphi 0, %s111
    %s126 = sphi 0, %s112
    %s130 = sphi 0, %s130
    %s132 = sphi 0, %s130
    %s133 = sphi 0, %s132
    %s147 = sphi 0, %s133
    %s153 = sphi 0, %s155
    %s156 = sphi 0, %s153
    %s157 = sphi 0, %s156
    %s173 = sphi 0, %s157
  $region4: #{concat64_2_forward.1} parent=0 // loop_header_branch
    %15 = sbr.rel (%p13) target = $region8
  $region5: #{concat64_2_forward.1} parent=0 // loop_body
    %s17 = ssub.s32 %s12, 1
    %s18 = ssub.s32 %s12, 2
    %s19 = sadd.s32 %s12, 1
    %s20 = ssub.s32 %s12, %s19
    %p21 = scmp.eq.s32.totalorder %s20, 0
    %s23 = sadd.s32 %s22, 1
    %s24 = scalar_select %p21, %s22, %s23
    %p27 = pneg %p21
    %p28 = scmp.eq.s32.totalorder %s12, 1
    %p29 = por %p27, %p28
    %p30 = scmp.ne.s32.totalorder %s22, %s25
    %p31 = scmp.eq.s32.totalorder %s12, 0
    %p32 = por %p30, %p31
    %p33 = scmp.ne.s32.totalorder %s22, %s25
    %p34 = scmp.eq.s32.totalorder %s17, 1
    %p35 = por %p33, %p34
    %p36 = scmp.ne.s32.totalorder %s25, %s26
    %p37 = scmp.eq.s32.totalorder %s17, 0
    %p38 = por %p36, %p37
    %p39 = scmp.ne.s32.totalorder %s25, %s26
    %p40 = scmp.eq.s32.totalorder %s18, 1
    %p41 = por %p39, %p40
    %p43 = scmp.ne.s32.totalorder %s26, %s42
    %p44 = scmp.eq.s32.totalorder %s18, 0
    %p45 = por %p43, %p44
    %s47 = sadd.s32 %s46, 1
    %p50 = scmp.eq.s32.totalorder %s12, 1
    %p51 = scmp.ne.s32.totalorder %s46, %s48
    %p52 = scmp.eq.s32.totalorder %s12, 0
    %p53 = por %p51, %p52
    %p54 = scmp.ne.s32.totalorder %s46, %s48
    %p55 = scmp.eq.s32.totalorder %s17, 1
    %p56 = por %p54, %p55
    %p57 = scmp.ne.s32.totalorder %s48, %s49
    %p58 = scmp.eq.s32.totalorder %s17, 0
    %p59 = por %p57, %p58
    %p60 = scmp.ne.s32.totalorder %s48, %s49
    %p61 = scmp.eq.s32.totalorder %s18, 1
    %p62 = por %p60, %p61
    %p64 = scmp.ne.s32.totalorder %s49, %s63
    %p65 = scmp.eq.s32.totalorder %s18, 0
    %p66 = por %p64, %p65
    %s68 = sadd.s32 %s67, 1
    %p71 = scmp.eq.s32.totalorder %s12, 1
    %p72 = scmp.ne.s32.totalorder %s67, %s69
    %p73 = scmp.eq.s32.totalorder %s12, 0
    %p74 = por %p72, %p73
    %p75 = scmp.ne.s32.totalorder %s67, %s69
    %p76 = scmp.eq.s32.totalorder %s17, 1
    %p77 = por %p75, %p76
    %p78 = scmp.ne.s32.totalorder %s69, %s70
    %p79 = scmp.eq.s32.totalorder %s17, 0
    %p80 = por %p78, %p79
    %p81 = scmp.ne.s32.totalorder %s69, %s70
    %p82 = scmp.eq.s32.totalorder %s18, 1
    %p83 = por %p81, %p82
    %p85 = scmp.ne.s32.totalorder %s70, %s84
    %p86 = scmp.eq.s32.totalorder %s18, 0
    %p87 = por %p85, %p86
    %s89 = sadd.s32 %s88, 1
    %p92 = scmp.eq.s32.totalorder %s12, 1
    %p93 = scmp.ne.s32.totalorder %s88, %s90
    %p94 = scmp.eq.s32.totalorder %s12, 0
    %p95 = por %p93, %p94
    %p96 = scmp.ne.s32.totalorder %s88, %s90
    %p97 = scmp.eq.s32.totalorder %s17, 1
    %p98 = por %p96, %p97
    %p99 = scmp.ne.s32.totalorder %s90, %s91
    %p100 = scmp.eq.s32.totalorder %s17, 0
    %p101 = por %p99, %p100
    %p102 = scmp.ne.s32.totalorder %s90, %s91
    %p103 = scmp.eq.s32.totalorder %s18, 1
    %p104 = por %p102, %p103
    %p106 = scmp.ne.s32.totalorder %s91, %s105
    %p107 = scmp.eq.s32.totalorder %s18, 0
    %p108 = por %p106, %p107
    %s110 = sadd.s32 %s109, 1
    %p113 = scmp.eq.s32.totalorder %s12, 1
    %p114 = scmp.ne.s32.totalorder %s109, %s111
    %p115 = scmp.eq.s32.totalorder %s12, 0
    %p116 = por %p114, %p115
    %p117 = scmp.ne.s32.totalorder %s109, %s111
    %p118 = scmp.eq.s32.totalorder %s17, 1
    %p119 = por %p117, %p118
    %p120 = scmp.ne.s32.totalorder %s111, %s112
    %p121 = scmp.eq.s32.totalorder %s17, 0
    %p122 = por %p120, %p121
    %p123 = scmp.ne.s32.totalorder %s111, %s112
    %p124 = scmp.eq.s32.totalorder %s18, 1
    %p125 = por %p123, %p124
    %p127 = scmp.ne.s32.totalorder %s112, %s126
    %p128 = scmp.eq.s32.totalorder %s18, 0
    %p129 = por %p127, %p128
    %s131 = sadd.s32 %s130, 1
    %p134 = scmp.eq.s32.totalorder %s12, 1
    %p135 = scmp.ne.s32.totalorder %s130, %s132
    %p136 = scmp.eq.s32.totalorder %s12, 0
    %p137 = por %p135, %p136
    %p138 = scmp.ne.s32.totalorder %s130, %s132
    %p139 = scmp.eq.s32.totalorder %s17, 1
    %p140 = por %p138, %p139
    %p141 = scmp.ne.s32.totalorder %s132, %s133
    %p142 = scmp.eq.s32.totalorder %s17, 0
    %p143 = por %p141, %p142
    %p144 = scmp.ne.s32.totalorder %s132, %s133
    %p145 = scmp.eq.s32.totalorder %s18, 1
    %p146 = por %p144, %p145
    %p148 = scmp.ne.s32.totalorder %s133, %s147
    %p149 = scmp.eq.s32.totalorder %s18, 0
    %p150 = por %p148, %p149
    %s151 = ssub.s32 %s12, %s19
    %p152 = scmp.eq.s32.totalorder %s151, 0
    %s154 = sadd.s32 %s153, 1
    %s155 = scalar_select %p152, %s153, %s154
    %p158 = pneg %p152
    %p159 = scmp.eq.s32.totalorder %s12, 1
    %p160 = por %p158, %p159
    %p161 = scmp.ne.s32.totalorder %s153, %s156
    %p162 = scmp.eq.s32.totalorder %s12, 0
    %p163 = por %p161, %p162
    %p164 = scmp.ne.s32.totalorder %s153, %s156
    %p165 = scmp.eq.s32.totalorder %s17, 1
    %p166 = por %p164, %p165
    %p167 = scmp.ne.s32.totalorder %s156, %s157
    %p168 = scmp.eq.s32.totalorder %s17, 0
    %p169 = por %p167, %p168
    %p170 = scmp.ne.s32.totalorder %s156, %s157
    %p171 = scmp.eq.s32.totalorder %s18, 1
    %p172 = por %p170, %p171
    %p174 = scmp.ne.s32.totalorder %s157, %s173
    %p175 = scmp.eq.s32.totalorder %s18, 0
    %p176 = por %p174, %p175
    %p177 = scmp.le.s32.totalorder 1, %s12
    %p178 = scmp.lt.s32.totalorder %s12, 3
    %p179 = pnand %p177, %p178
    %p180 = pneg %p179
    // Predicated region
    $region9: #{concat64_2_forward.1} parent=5 // pred_check
      _
    $region10: #{concat64_2_forward.1} parent=5 // pred_check_branch
      %182 = sbr.rel (%p179) target = $region12
    $region11: #{concat64_2_forward.1} parent=5 // pred_region
      %s183 = ssub.s32 %s12, 1
      // Predicated region
      $region13: #{concat64_2_forward.1} parent=11 // pred_check
        %p184 = pneg %p59
      $region14: #{concat64_2_forward.1} parent=11 // pred_check_branch
        %186 = sbr.rel (%p184) target = $region16
      $region15: #{concat64_2_forward.1} parent=11 // pred_region
        _
      $region16: #{concat64_2_forward.1} parent=11 // pred_fallthru
        _
      // Predicated region
      $region17: #{concat64_2_forward.1} parent=11 // pred_check
        %p187 = pneg %p80
      $region18: #{concat64_2_forward.1} parent=11 // pred_check_branch
        %189 = sbr.rel (%p187) target = $region20
      $region19: #{concat64_2_forward.1} parent=11 // pred_region
        _
      $region20: #{concat64_2_forward.1} parent=11 // pred_fallthru
        _
      // Predicated region
      $region21: #{concat64_2_forward.1} parent=11 // pred_check
        %p190 = pneg %p101
      $region22: #{concat64_2_forward.1} parent=11 // pred_check_branch
        %192 = sbr.rel (%p190) target = $region24
      $region23: #{concat64_2_forward.1} parent=11 // pred_region
        _
      $region24: #{concat64_2_forward.1} parent=11 // pred_fallthru
        _
      // Predicated region
      $region25: #{concat64_2_forward.1} parent=11 // pred_check
        %p193 = pneg %p122
      $region26: #{concat64_2_forward.1} parent=11 // pred_check_branch
        %195 = sbr.rel (%p193) target = $region28
      $region27: #{concat64_2_forward.1} parent=11 // pred_region
        _
      $region28: #{concat64_2_forward.1} parent=11 // pred_fallthru
        _
      // Predicated region
      $region29: #{concat64_2_forward.1} parent=11 // pred_check
        %p196 = pneg %p143
      $region30: #{concat64_2_forward.1} parent=11 // pred_check_branch
        %198 = sbr.rel (%p196) target = $region32
      $region31: #{concat64_2_forward.1} parent=11 // pred_region
        _
      $region32: #{concat64_2_forward.1} parent=11 // pred_fallthru
        _
    $region12: #{concat64_2_forward.1} parent=5 // pred_fallthru
      _
    %p199 = scmp.lt.s32.totalorder %s12, 2
    // Predicated region
    $region33: #{concat64_2_forward.1} parent=5 // pred_check
      %p200 = pneg %p199
    $region34: #{concat64_2_forward.1} parent=5 // pred_check_branch
      %202 = sbr.rel (%p200) target = $region36
    $region35: #{concat64_2_forward.1} parent=5 // pred_region
      // Predicated region
      $region37: #{concat64_2_forward.1} parent=35 // pred_check
        %p203 = pneg %p32
      $region38: #{concat64_2_forward.1} parent=35 // pred_check_branch
        %205 = sbr.rel (%p203) target = $region40
      $region39: #{concat64_2_forward.1} parent=35 // pred_region
        %s206 = smul.u32 2, %s12
        %p207 = scmp.lt.s32.totalorder %s206, 3
        %s208 = scalar_select %p207, %s206, 3
        %s209 = smul.addr %s208, 5
        %s210 = smul.addr %s209, 8
        %s211 = scalar_lea.vmem %s0, %s210
        %s212 = smul.u32 2, %s12
      $region40: #{concat64_2_forward.1} parent=35 // pred_fallthru
        _
    $region36: #{concat64_2_forward.1} parent=5 // pred_fallthru
      _
    %p213 = scmp.le.s32.totalorder 1, %s12
    %p214 = scmp.lt.s32.totalorder %s12, 3
    %p215 = pnand %p213, %p214
    %p216 = pneg %p215
    // Predicated region
    $region41: #{concat64_2_forward.1} parent=5 // pred_check
      _
    $region42: #{concat64_2_forward.1} parent=5 // pred_check_branch
      %218 = sbr.rel (%p215) target = $region44
    $region43: #{concat64_2_forward.1} parent=5 // pred_region
      %s219 = ssub.s32 %s12, 1
      %s220 = smul.u32 2, %s17
      %p221 = scmp.lt.s32.totalorder %s220, 3
      %s222 = scalar_select %p221, %s220, 3
      %s223 = smul.addr %s222, 5
      %s224 = smul.addr %s223, 8
      %s225 = scalar_lea.vmem %s0, %s224
      %p226 = pneg %p38
      %p227 = pneg %p35
      %p228 = pneg %p59
      %p229 = pneg %p56
      %p230 = pneg %p80
      %p231 = pneg %p77
      %p232 = pneg %p101
      %p233 = pneg %p98
      %p234 = pneg %p122
      %p235 = pneg %p119
      %p236 = pneg %p143
      %p237 = pneg %p140
      %p238 = pneg %p169
      %p239 = pneg %p166
      %s240 = smul.u32 2, %s17
      %p241 = scmp.lt.s32.totalorder %s240, 3
      %s242 = scalar_select %p241, %s240, 3
      %s243 = smul.addr %s242, 3
      %s244 = smul.addr %s243, 4
      %s245 = scalar_lea.vmem %s6, %s244
      %s246 = smul.u32 2, %s17
      %p247 = scmp.lt.s32.totalorder %s246, 3
      %s248 = scalar_select %p247, %s246, 3
      %s249 = smul.addr %s248, 5
      %s250 = smul.addr %s249, 8
      %s251 = scalar_lea.vmem %s0, %s250
      %s252 = smul.u32 2, %s17
      %s253 = smul.u32 2, %s17
      %p254 = scmp.lt.s32.totalorder %s253, 3
      %s255 = scalar_select %p254, %s253, 3
      %s256 = smul.addr %s255, 3
      %s257 = smul.addr %s256, 4
      %s258 = scalar_lea.vmem %s6, %s257
      %s259 = smul.u32 2, %s17
      %v261 = vld [vmem:[%s251] sm:$0xff]
      %v262 = vld [vmem:[%s251 + $0x8] sm:$0xff]
      %v263 = vld [vmem:[%s251 + $0x10] sm:$0xff]
      %v264 = vld [vmem:[%s251 + $0x18] sm:$0xff]
      %s265 = scalar_lea.vmem %s251, 40
      %v266 = vld [vmem:[%s265] sm:$0xff]
      %v267 = vld [vmem:[%s265 + $0x8] sm:$0xff]
      %v268 = vld [vmem:[%s265 + $0x10] sm:$0xff]
      %v269 = vld [vmem:[%s265 + $0x18] sm:$0xff]
      %v270 = vld [vmem:[%s251 + $0x20] sm:$0xff]
      %v271 = vld [vmem:[%s265 + $0x20] sm:$0xff]
      %277 = vrot.lane.b32.xlu0 %v261, 127
      %v278 = vpop.permute.xlu0 %277
      %279 = vrot.lane.b32.xlu0 %v262, 127
      %v280 = vpop.permute.xlu0 %279
      %281 = vrot.lane.b32.xlu0 %v263, 127
      %v282 = vpop.permute.xlu0 %281
      %283 = vrot.lane.b32.xlu0 %v264, 127
      %v284 = vpop.permute.xlu0 %283
      %285 = vrot.lane.b32.xlu0 %v270, 127
      %v286 = vpop.permute.xlu0 %285
      %vm287 = vcmask 1039360
      %v288 = vsel %vm287, %v278, %v280
      %v289 = vsel %vm287, %v280, %v282
      %v290 = vsel %vm287, %v282, %v284
      %v291 = vsel %vm287, %v284, %v286
      %301 = vrot.lane.b32.xlu0 %v266, 127
      %v302 = vpop.permute.xlu0 %301
      %303 = vrot.lane.b32.xlu0 %v267, 127
      %v304 = vpop.permute.xlu0 %303
      %305 = vrot.lane.b32.xlu0 %v268, 127
      %v306 = vpop.permute.xlu0 %305
      %307 = vrot.lane.b32.xlu0 %v269, 127
      %v308 = vpop.permute.xlu0 %307
      %309 = vrot.lane.b32.xlu0 %v271, 127
      %v310 = vpop.permute.xlu0 %309
      %v311 = vsel %vm287, %v302, %v304
      %v312 = vsel %vm287, %v304, %v306
      %v313 = vsel %vm287, %v306, %v308
      %v314 = vsel %vm287, %v308, %v310
      %319 = vrot.lane.b32.xlu0 %v261, 126
      %v320 = vpop.permute.xlu0 %319
      %321 = vrot.lane.b32.xlu0 %v262, 126
      %v322 = vpop.permute.xlu0 %321
      %323 = vrot.lane.b32.xlu0 %v263, 126
      %v324 = vpop.permute.xlu0 %323
      %325 = vrot.lane.b32.xlu0 %v264, 126
      %v326 = vpop.permute.xlu0 %325
      %327 = vrot.lane.b32.xlu0 %v270, 126
      %v328 = vpop.permute.xlu0 %327
      %vm329 = vcmask 1031168
      %v330 = vsel %vm329, %v320, %v322
      %v331 = vsel %vm329, %v322, %v324
      %v332 = vsel %vm329, %v324, %v326
      %v333 = vsel %vm329, %v326, %v328
      %338 = vrot.lane.b32.xlu0 %v266, 126
      %v339 = vpop.permute.xlu0 %338
      %340 = vrot.lane.b32.xlu0 %v267, 126
      %v341 = vpop.permute.xlu0 %340
      %342 = vrot.lane.b32.xlu0 %v268, 126
      %v343 = vpop.permute.xlu0 %342
      %344 = vrot.lane.b32.xlu0 %v269, 126
      %v345 = vpop.permute.xlu0 %344
      %346 = vrot.lane.b32.xlu0 %v271, 126
      %v347 = vpop.permute.xlu0 %346
      %v348 = vsel %vm329, %v339, %v341
      %v349 = vsel %vm329, %v341, %v343
      %v350 = vsel %vm329, %v343, %v345
      %v351 = vsel %vm329, %v345, %v347
      %356 = vrot.lane.b32.xlu0 %v261, 108
      %v357 = vpop.permute.xlu0 %356
      %358 = vrot.lane.b32.xlu0 %v262, 108
      %v359 = vpop.permute.xlu0 %358
      %360 = vrot.lane.b32.xlu0 %v263, 108
      %v361 = vpop.permute.xlu0 %360
      %362 = vrot.lane.b32.xlu0 %v264, 108
      %v363 = vpop.permute.xlu0 %362
      %364 = vrot.lane.b32.xlu0 %v270, 108
      %v365 = vpop.permute.xlu0 %364
      %vm366 = vcmask 883712
      %v367 = vsel %vm366, %v357, %v359
      %v368 = vsel %vm366, %v359, %v361
      %v369 = vsel %vm366, %v361, %v363
      %v370 = vsel %vm366, %v363, %v365
      %375 = vrot.lane.b32.xlu0 %v266, 108
      %v376 = vpop.permute.xlu0 %375
      %377 = vrot.lane.b32.xlu0 %v267, 108
      %v378 = vpop.permute.xlu0 %377
      %379 = vrot.lane.b32.xlu0 %v268, 108
      %v380 = vpop.permute.xlu0 %379
      %381 = vrot.lane.b32.xlu0 %v269, 108
      %v382 = vpop.permute.xlu0 %381
      %383 = vrot.lane.b32.xlu0 %v271, 108
      %v384 = vpop.permute.xlu0 %383
      %v385 = vsel %vm366, %v376, %v378
      %v386 = vsel %vm366, %v378, %v380
      %v387 = vsel %vm366, %v380, %v382
      %v388 = vsel %vm366, %v382, %v384
      %393 = vrot.lane.b32.xlu0 %v261, 107
      %v394 = vpop.permute.xlu0 %393
      %395 = vrot.lane.b32.xlu0 %v262, 107
      %v396 = vpop.permute.xlu0 %395
      %397 = vrot.lane.b32.xlu0 %v263, 107
      %v398 = vpop.permute.xlu0 %397
      %399 = vrot.lane.b32.xlu0 %v264, 107
      %v400 = vpop.permute.xlu0 %399
      %401 = vrot.lane.b32.xlu0 %v270, 107
      %v402 = vpop.permute.xlu0 %401
      %vm403 = vcmask 875520
      %v404 = vsel %vm403, %v394, %v396
      %v405 = vsel %vm403, %v396, %v398
      %v406 = vsel %vm403, %v398, %v400
      %v407 = vsel %vm403, %v400, %v402
      %412 = vrot.lane.b32.xlu0 %v266, 107
      %v413 = vpop.permute.xlu0 %412
      %414 = vrot.lane.b32.xlu0 %v267, 107
      %v415 = vpop.permute.xlu0 %414
      %416 = vrot.lane.b32.xlu0 %v268, 107
      %v417 = vpop.permute.xlu0 %416
      %418 = vrot.lane.b32.xlu0 %v269, 107
      %v419 = vpop.permute.xlu0 %418
      %420 = vrot.lane.b32.xlu0 %v271, 107
      %v421 = vpop.permute.xlu0 %420
      %v422 = vsel %vm403, %v413, %v415
      %v423 = vsel %vm403, %v415, %v417
      %v424 = vsel %vm403, %v417, %v419
      %v425 = vsel %vm403, %v419, %v421
      %430 = vrot.lane.b32.xlu0 %v261, 106
      %v431 = vpop.permute.xlu0 %430
      %432 = vrot.lane.b32.xlu0 %v262, 106
      %v433 = vpop.permute.xlu0 %432
      %434 = vrot.lane.b32.xlu0 %v263, 106
      %v435 = vpop.permute.xlu0 %434
      %436 = vrot.lane.b32.xlu0 %v264, 106
      %v437 = vpop.permute.xlu0 %436
      %438 = vrot.lane.b32.xlu0 %v270, 106
      %v439 = vpop.permute.xlu0 %438
      %vm440 = vcmask 867328
      %v441 = vsel %vm440, %v431, %v433
      %v442 = vsel %vm440, %v433, %v435
      %v443 = vsel %vm440, %v435, %v437
      %v444 = vsel %vm440, %v437, %v439
      %449 = vrot.lane.b32.xlu0 %v266, 106
      %v450 = vpop.permute.xlu0 %449
      %451 = vrot.lane.b32.xlu0 %v267, 106
      %v452 = vpop.permute.xlu0 %451
      %453 = vrot.lane.b32.xlu0 %v268, 106
      %v454 = vpop.permute.xlu0 %453
      %455 = vrot.lane.b32.xlu0 %v269, 106
      %v456 = vpop.permute.xlu0 %455
      %457 = vrot.lane.b32.xlu0 %v271, 106
      %v458 = vpop.permute.xlu0 %457
      %v459 = vsel %vm440, %v450, %v452
      %v460 = vsel %vm440, %v452, %v454
      %v461 = vsel %vm440, %v454, %v456
      %v462 = vsel %vm440, %v456, %v458
      %467 = vrot.lane.b32.xlu0 %v261, 88
      %v468 = vpop.permute.xlu0 %467
      %469 = vrot.lane.b32.xlu0 %v262, 88
      %v470 = vpop.permute.xlu0 %469
      %471 = vrot.lane.b32.xlu0 %v263, 88
      %v472 = vpop.permute.xlu0 %471
      %473 = vrot.lane.b32.xlu0 %v264, 88
      %v474 = vpop.permute.xlu0 %473
      %475 = vrot.lane.b32.xlu0 %v270, 88
      %v476 = vpop.permute.xlu0 %475
      %vm477 = vcmask 719872
      %v478 = vsel %vm477, %v468, %v470
      %v479 = vsel %vm477, %v470, %v472
      %v480 = vsel %vm477, %v472, %v474
      %v481 = vsel %vm477, %v474, %v476
      %486 = vrot.lane.b32.xlu0 %v266, 88
      %v487 = vpop.permute.xlu0 %486
      %488 = vrot.lane.b32.xlu0 %v267, 88
      %v489 = vpop.permute.xlu0 %488
      %490 = vrot.lane.b32.xlu0 %v268, 88
      %v491 = vpop.permute.xlu0 %490
      %492 = vrot.lane.b32.xlu0 %v269, 88
      %v493 = vpop.permute.xlu0 %492
      %494 = vrot.lane.b32.xlu0 %v271, 88
      %v495 = vpop.permute.xlu0 %494
      %v496 = vsel %vm477, %v487, %v489
      %v497 = vsel %vm477, %v489, %v491
      %v498 = vsel %vm477, %v491, %v493
      %v499 = vsel %vm477, %v493, %v495
      %504 = vrot.lane.b32.xlu0 %v261, 87
      %v505 = vpop.permute.xlu0 %504
      %506 = vrot.lane.b32.xlu0 %v262, 87
      %v507 = vpop.permute.xlu0 %506
      %508 = vrot.lane.b32.xlu0 %v263, 87
      %v509 = vpop.permute.xlu0 %508
      %510 = vrot.lane.b32.xlu0 %v264, 87
      %v511 = vpop.permute.xlu0 %510
      %512 = vrot.lane.b32.xlu0 %v270, 87
      %v513 = vpop.permute.xlu0 %512
      %vm514 = vcmask 711680
      %v515 = vsel %vm514, %v505, %v507
      %v516 = vsel %vm514, %v507, %v509
      %v517 = vsel %vm514, %v509, %v511
      %v518 = vsel %vm514, %v511, %v513
      %523 = vrot.lane.b32.xlu0 %v266, 87
      %v524 = vpop.permute.xlu0 %523
      %525 = vrot.lane.b32.xlu0 %v267, 87
      %v526 = vpop.permute.xlu0 %525
      %527 = vrot.lane.b32.xlu0 %v268, 87
      %v528 = vpop.permute.xlu0 %527
      %529 = vrot.lane.b32.xlu0 %v269, 87
      %v530 = vpop.permute.xlu0 %529
      %531 = vrot.lane.b32.xlu0 %v271, 87
      %v532 = vpop.permute.xlu0 %531
      %v533 = vsel %vm514, %v524, %v526
      %v534 = vsel %vm514, %v526, %v528
      %v535 = vsel %vm514, %v528, %v530
      %v536 = vsel %vm514, %v530, %v532
      %541 = vrot.lane.b32.xlu0 %v261, 86
      %v542 = vpop.permute.xlu0 %541
      %543 = vrot.lane.b32.xlu0 %v262, 86
      %v544 = vpop.permute.xlu0 %543
      %545 = vrot.lane.b32.xlu0 %v263, 86
      %v546 = vpop.permute.xlu0 %545
      %547 = vrot.lane.b32.xlu0 %v264, 86
      %v548 = vpop.permute.xlu0 %547
      %549 = vrot.lane.b32.xlu0 %v270, 86
      %v550 = vpop.permute.xlu0 %549
      %vm551 = vcmask 703488
      %v552 = vsel %vm551, %v542, %v544
      %v553 = vsel %vm551, %v544, %v546
      %v554 = vsel %vm551, %v546, %v548
      %v555 = vsel %vm551, %v548, %v550
      %560 = vrot.lane.b32.xlu0 %v266, 86
      %v561 = vpop.permute.xlu0 %560
      %562 = vrot.lane.b32.xlu0 %v267, 86
      %v563 = vpop.permute.xlu0 %562
      %564 = vrot.lane.b32.xlu0 %v268, 86
      %v565 = vpop.permute.xlu0 %564
      %566 = vrot.lane.b32.xlu0 %v269, 86
      %v567 = vpop.permute.xlu0 %566
      %568 = vrot.lane.b32.xlu0 %v271, 86
      %v569 = vpop.permute.xlu0 %568
      %v570 = vsel %vm551, %v561, %v563
      %v571 = vsel %vm551, %v563, %v565
      %v572 = vsel %vm551, %v565, %v567
      %v573 = vsel %vm551, %v567, %v569
      %v578 = vld [vmem:[%s1] sm:$0xf]
      %v579 = vpack.c.bf16 %v288, %v261
      %v580 = vpack.c.bf16 %v289, %v262
      %v581 = vpack.c.bf16 %v290, %v263
      %v582 = vpack.c.bf16 %v291, %v264
      %v583 = vpack.c.bf16 %v311, %v266
      %v584 = vpack.c.bf16 %v312, %v267
      %v585 = vpack.c.bf16 %v313, %v268
      %v586 = vpack.c.bf16 %v314, %v269
      %v587 = vpack.c.bf16 %v367, %v330
      %v588 = vpack.c.bf16 %v368, %v331
      %v589 = vpack.c.bf16 %v369, %v332
      %v590 = vpack.c.bf16 %v370, %v333
      %v591 = vpack.c.bf16 %v385, %v348
      %v592 = vpack.c.bf16 %v386, %v349
      %v593 = vpack.c.bf16 %v387, %v350
      %v594 = vpack.c.bf16 %v388, %v351
      %v595 = vpack.c.bf16 %v441, %v404
      %v596 = vpack.c.bf16 %v442, %v405
      %v597 = vpack.c.bf16 %v443, %v406
      %v598 = vpack.c.bf16 %v444, %v407
      %v599 = vpack.c.bf16 %v459, %v422
      %v600 = vpack.c.bf16 %v460, %v423
      %v601 = vpack.c.bf16 %v461, %v424
      %v602 = vpack.c.bf16 %v462, %v425
      %v603 = vpack.c.bf16 %v515, %v478
      %v604 = vpack.c.bf16 %v516, %v479
      %v605 = vpack.c.bf16 %v517, %v480
      %v606 = vpack.c.bf16 %v518, %v481
      %v607 = vpack.c.bf16 %v533, %v496
      %v608 = vpack.c.bf16 %v534, %v497
      %v609 = vpack.c.bf16 %v535, %v498
      %v610 = vpack.c.bf16 %v536, %v499
      %v611 = vpack.c.bf16 %v552, %v552
      %v612 = vpack.c.bf16 %v553, %v553
      %v613 = vpack.c.bf16 %v554, %v554
      %v614 = vpack.c.bf16 %v555, %v555
      %v615 = vpack.c.bf16 %v570, %v570
      %v616 = vpack.c.bf16 %v571, %v571
      %v617 = vpack.c.bf16 %v572, %v572
      %v618 = vpack.c.bf16 %v573, %v573
      %v619 = vld [vmem:[%s2] sm:$0xff]
      %621 = vset.pattern.permute.xlu0 0
      %622 = vperm.xlu0 %621, %v619
      %v623 = vpop.permute.xlu0 %622
      %vm625 = vcmask 588800
      %v627 = vsel %vm625, %v578, 0
      %vm629 = vcmask 1043456
      %v631 = vsel %vm629, %v611, 0
      %v634 = vsel %vm629, %v612, 0
      %v637 = vsel %vm629, %v613, 0
      %v640 = vsel %vm629, %v614, 0
      %v643 = vsel %vm629, %v615, 0
      %v646 = vsel %vm629, %v616, 0
      %v649 = vsel %vm629, %v617, 0
      %v652 = vsel %vm629, %v618, 0
      %654 = vmatprep.subr.bf16.mxu0 0
      %655 = vmatpush1.bf16.msra.mxu0 0
      %656 = vmatprep.subr.bf16.mxu0 0
      %657 = vmatpush1.bf16.msra.mxu0 0
      %658 = vmatprep.subr.bf16.mxu0 0
      %659 = vmatpush1.bf16.msra.mxu0 0
      %660 = vmatprep.subr.bf16.mxu0 %v634
      %661 = vmatpush1.bf16.msra.mxu0 %v631
      %662 = vmatprep.subr.bf16.mxu0 %v604
      %663 = vmatpush1.bf16.msra.mxu0 %v603
      %664 = vmatprep.subr.bf16.mxu0 %v596
      %665 = vmatpush1.bf16.msra.mxu0 %v595
      %666 = vmatprep.subr.bf16.mxu0 %v588
      %667 = vmatpush1.bf16.msra.mxu0 %v587
      %668 = vmatprep.subr.bf16.mxu0 %v580
      %669 = vmatpush1.bf16.msra.mxu0 %v579
      %670 = vmatprep.subr.bf16.mxu0 0
      %671 = vmatpush2.bf16.msra.mxu0 0
      %672 = vmatprep.subr.bf16.mxu0 0
      %673 = vmatpush2.bf16.msra.mxu0 0
      %674 = vmatprep.subr.bf16.mxu0 0
      %675 = vmatpush2.bf16.msra.mxu0 0
      %676 = vmatprep.subr.bf16.mxu0 0
      %677 = vmatpush2.bf16.msra.mxu0 0
      %678 = vmatprep.subr.bf16.mxu0 0
      %679 = vmatpush2.bf16.msra.mxu0 0
      %680 = vmatprep.subr.bf16.mxu0 0
      %681 = vmatpush2.bf16.msra.mxu0 0
      %682 = vmatprep.subr.bf16.mxu0 0
      %683 = vmatpush2.bf16.msra.mxu0 0
      %684 = vmatprep.subr.bf16.mxu0 0
      %685 = vmatpush2.bf16.msra.mxu0 0
      %686 = vmatprep.mubr.bf16.mxu0 0
      %687 = vmatmul.mubr.bf16.gmra.mxu0 %v627
      %v688 = vpop.f32.mrf.mxu0
      %v689 = vadd.f32 %v623, %v688
      %v690 = vpop.f32.mrf.mxu0
      %v691 = vadd.f32 %v623, %v690
      %v692 = vpop.f32.mrf.mxu0
      %v693 = vpop.f32.mrf.mxu0
      %694 = vdwg.mxu0
      %695 = vmatprep.subr.bf16.mxu0 0
      %696 = vmatpush1.bf16.msra.mxu0 0
      %697 = vmatprep.subr.bf16.mxu0 0
      %698 = vmatpush1.bf16.msra.mxu0 0
      %699 = vmatprep.subr.bf16.mxu0 0
      %700 = vmatpush1.bf16.msra.mxu0 0
      %701 = vmatprep.subr.bf16.mxu0 %v640
      %702 = vmatpush1.bf16.msra.mxu0 %v637
      %703 = vmatprep.subr.bf16.mxu0 %v606
      %704 = vmatpush1.bf16.msra.mxu0 %v605
      %705 = vmatprep.subr.bf16.mxu0 %v598
      %706 = vmatpush1.bf16.msra.mxu0 %v597
      %707 = vmatprep.subr.bf16.mxu0 %v590
      %708 = vmatpush1.bf16.msra.mxu0 %v589
      %709 = vmatprep.subr.bf16.mxu0 %v582
      %710 = vmatpush1.bf16.msra.mxu0 %v581
      %711 = vmatprep.subr.bf16.mxu0 0
      %712 = vmatpush2.bf16.msra.mxu0 0
      %713 = vmatprep.subr.bf16.mxu0 0
      %714 = vmatpush2.bf16.msra.mxu0 0
      %715 = vmatprep.subr.bf16.mxu0 0
      %716 = vmatpush2.bf16.msra.mxu0 0
      %717 = vmatprep.subr.bf16.mxu0 0
      %718 = vmatpush2.bf16.msra.mxu0 0
      %719 = vmatprep.subr.bf16.mxu0 0
      %720 = vmatpush2.bf16.msra.mxu0 0
      %721 = vmatprep.subr.bf16.mxu0 0
      %722 = vmatpush2.bf16.msra.mxu0 0
      %723 = vmatprep.subr.bf16.mxu0 0
      %724 = vmatpush2.bf16.msra.mxu0 0
      %725 = vmatprep.subr.bf16.mxu0 0
      %726 = vmatpush2.bf16.msra.mxu0 0
      %727 = vmatprep.mubr.bf16.mxu0 0
      %728 = vmatmul.mubr.bf16.gmra.mxu0 %v627
      %v729 = vpop.f32.mrf.mxu0
      %v730 = vadd.f32 %v623, %v729
      %v731 = vpop.f32.mrf.mxu0
      %v732 = vadd.f32 %v623, %v731
      %v733 = vpop.f32.mrf.mxu0
      %v734 = vpop.f32.mrf.mxu0
      %735 = vdwg.mxu0
      %736 = vmatprep.subr.bf16.mxu0 0
      %737 = vmatpush1.bf16.msra.mxu0 0
      %738 = vmatprep.subr.bf16.mxu0 0
      %739 = vmatpush1.bf16.msra.mxu0 0
      %740 = vmatprep.subr.bf16.mxu0 0
      %741 = vmatpush1.bf16.msra.mxu0 0
      %742 = vmatprep.subr.bf16.mxu0 %v646
      %743 = vmatpush1.bf16.msra.mxu0 %v643
      %744 = vmatprep.subr.bf16.mxu0 %v608
      %745 = vmatpush1.bf16.msra.mxu0 %v607
      %746 = vmatprep.subr.bf16.mxu0 %v600
      %747 = vmatpush1.bf16.msra.mxu0 %v599
      %748 = vmatprep.subr.bf16.mxu0 %v592
      %749 = vmatpush1.bf16.msra.mxu0 %v591
      %750 = vmatprep.subr.bf16.mxu0 %v584
      %751 = vmatpush1.bf16.msra.mxu0 %v583
      %752 = vmatprep.subr.bf16.mxu0 0
      %753 = vmatpush2.bf16.msra.mxu0 0
      %754 = vmatprep.subr.bf16.mxu0 0
      %755 = vmatpush2.bf16.msra.mxu0 0
      %756 = vmatprep.subr.bf16.mxu0 0
      %757 = vmatpush2.bf16.msra.mxu0 0
      %758 = vmatprep.subr.bf16.mxu0 0
      %759 = vmatpush2.bf16.msra.mxu0 0
      %760 = vmatprep.subr.bf16.mxu0 0
      %761 = vmatpush2.bf16.msra.mxu0 0
      %762 = vmatprep.subr.bf16.mxu0 0
      %763 = vmatpush2.bf16.msra.mxu0 0
      %764 = vmatprep.subr.bf16.mxu0 0
      %765 = vmatpush2.bf16.msra.mxu0 0
      %766 = vmatprep.subr.bf16.mxu0 0
      %767 = vmatpush2.bf16.msra.mxu0 0
      %768 = vmatprep.mubr.bf16.mxu0 0
      %769 = vmatmul.mubr.bf16.gmra.mxu0 %v627
      %v770 = vpop.f32.mrf.mxu0
      %v771 = vadd.f32 %v623, %v770
      %v772 = vpop.f32.mrf.mxu0
      %v773 = vadd.f32 %v623, %v772
      %v774 = vpop.f32.mrf.mxu0
      %v775 = vpop.f32.mrf.mxu0
      %776 = vdwg.mxu0
      %777 = vmatprep.subr.bf16.mxu0 0
      %778 = vmatpush1.bf16.msra.mxu0 0
      %779 = vmatprep.subr.bf16.mxu0 0
      %780 = vmatpush1.bf16.msra.mxu0 0
      %781 = vmatprep.subr.bf16.mxu0 0
      %782 = vmatpush1.bf16.msra.mxu0 0
      %783 = vmatprep.subr.bf16.mxu0 %v652
      %784 = vmatpush1.bf16.msra.mxu0 %v649
      %785 = vmatprep.subr.bf16.mxu0 %v610
      %786 = vmatpush1.bf16.msra.mxu0 %v609
      %787 = vmatprep.subr.bf16.mxu0 %v602
      %788 = vmatpush1.bf16.msra.mxu0 %v601
      %789 = vmatprep.subr.bf16.mxu0 %v594
      %790 = vmatpush1.bf16.msra.mxu0 %v593
      %791 = vmatprep.subr.bf16.mxu0 %v586
      %792 = vmatpush1.bf16.msra.mxu0 %v585
      %793 = vmatprep.subr.bf16.mxu0 0
      %794 = vmatpush2.bf16.msra.mxu0 0
      %795 = vmatprep.subr.bf16.mxu0 0
      %796 = vmatpush2.bf16.msra.mxu0 0
      %797 = vmatprep.subr.bf16.mxu0 0
      %798 = vmatpush2.bf16.msra.mxu0 0
      %799 = vmatprep.subr.bf16.mxu0 0
      %800 = vmatpush2.bf16.msra.mxu0 0
      %801 = vmatprep.subr.bf16.mxu0 0
      %802 = vmatpush2.bf16.msra.mxu0 0
      %803 = vmatprep.subr.bf16.mxu0 0
      %804 = vmatpush2.bf16.msra.mxu0 0
      %805 = vmatprep.subr.bf16.mxu0 0
      %806 = vmatpush2.bf16.msra.mxu0 0
      %807 = vmatprep.subr.bf16.mxu0 0
      %808 = vmatpush2.bf16.msra.mxu0 0
      %809 = vmatprep.mubr.bf16.mxu0 0
      %810 = vmatmul.mubr.bf16.gmra.mxu0 %v627
      %v811 = vpop.f32.mrf.mxu0
      %v812 = vadd.f32 %v623, %v811
      %v813 = vpop.f32.mrf.mxu0
      %v814 = vadd.f32 %v623, %v813
      %v815 = vpop.f32.mrf.mxu0
      %v816 = vpop.f32.mrf.mxu0
      %817 = vdwg.mxu0
      %v818 = vld [vmem:[%s5] sm:$0xff]
      %v819 = vld [vmem:[%s5 + $0x8] sm:$0xff]
      %v820 = vld [vmem:[%s5 + $0x10] sm:$0xff]
      %v821 = vld [vmem:[%s5 + $0x18] sm:$0xff]
      %v822 = vld [vmem:[%s5 + $0x20] sm:$0xff]
      %v823 = vld [vmem:[%s5 + $0x28] sm:$0xff]
      %v824 = vld [vmem:[%s5 + $0x30] sm:$0xff]
      %v825 = vld [vmem:[%s5 + $0x38] sm:$0xff]
      %v826 = vmul.f32 %v689, %v818
      %v827 = vmul.f32 %v691, %v819
      %v828 = vmul.f32 %v730, %v820
      %v829 = vmul.f32 %v732, %v821
      %v830 = vmul.f32 %v771, %v822
      %v831 = vmul.f32 %v773, %v823
      %v832 = vmul.f32 %v812, %v824
      %v833 = vmul.f32 %v814, %v825
      %838 = vrot.lane.b32.xlu0 %v826, 127
      %v839 = vpop.permute.xlu0 %838
      %840 = vrot.lane.b32.xlu0 %v827, 127
      %v841 = vpop.permute.xlu0 %840
      %842 = vrot.lane.b32.xlu0 %v828, 127
      %v843 = vpop.permute.xlu0 %842
      %844 = vrot.lane.b32.xlu0 %v829, 127
      %v845 = vpop.permute.xlu0 %844
      %v846 = vsel %vm287, %v839, %v841
      %v847 = vsel %vm287, %v841, %v843
      %v848 = vsel %vm287, %v843, %v845
      %856 = vrot.lane.b32.xlu0 %v830, 127
      %v857 = vpop.permute.xlu0 %856
      %858 = vrot.lane.b32.xlu0 %v831, 127
      %v859 = vpop.permute.xlu0 %858
      %860 = vrot.lane.b32.xlu0 %v832, 127
      %v861 = vpop.permute.xlu0 %860
      %862 = vrot.lane.b32.xlu0 %v833, 127
      %v863 = vpop.permute.xlu0 %862
      %v864 = vsel %vm287, %v857, %v859
      %v865 = vsel %vm287, %v859, %v861
      %v866 = vsel %vm287, %v861, %v863
      %870 = vrot.lane.b32.xlu0 %v826, 126
      %v871 = vpop.permute.xlu0 %870
      %872 = vrot.lane.b32.xlu0 %v827, 126
      %v873 = vpop.permute.xlu0 %872
      %874 = vrot.lane.b32.xlu0 %v828, 126
      %v875 = vpop.permute.xlu0 %874
      %876 = vrot.lane.b32.xlu0 %v829, 126
      %v877 = vpop.permute.xlu0 %876
      %v878 = vsel %vm329, %v871, %v873
      %v879 = vsel %vm329, %v873, %v875
      %v880 = vsel %vm329, %v875, %v877
      %884 = vrot.lane.b32.xlu0 %v830, 126
      %v885 = vpop.permute.xlu0 %884
      %886 = vrot.lane.b32.xlu0 %v831, 126
      %v887 = vpop.permute.xlu0 %886
      %888 = vrot.lane.b32.xlu0 %v832, 126
      %v889 = vpop.permute.xlu0 %888
      %890 = vrot.lane.b32.xlu0 %v833, 126
      %v891 = vpop.permute.xlu0 %890
      %v892 = vsel %vm329, %v885, %v887
      %v893 = vsel %vm329, %v887, %v889
      %v894 = vsel %vm329, %v889, %v891
      %898 = vrot.lane.b32.xlu0 %v826, 108
      %v899 = vpop.permute.xlu0 %898
      %900 = vrot.lane.b32.xlu0 %v827, 108
      %v901 = vpop.permute.xlu0 %900
      %902 = vrot.lane.b32.xlu0 %v828, 108
      %v903 = vpop.permute.xlu0 %902
      %904 = vrot.lane.b32.xlu0 %v829, 108
      %v905 = vpop.permute.xlu0 %904
      %v906 = vsel %vm366, %v899, %v901
      %v907 = vsel %vm366, %v901, %v903
      %v908 = vsel %vm366, %v903, %v905
      %912 = vrot.lane.b32.xlu0 %v830, 108
      %v913 = vpop.permute.xlu0 %912
      %914 = vrot.lane.b32.xlu0 %v831, 108
      %v915 = vpop.permute.xlu0 %914
      %916 = vrot.lane.b32.xlu0 %v832, 108
      %v917 = vpop.permute.xlu0 %916
      %918 = vrot.lane.b32.xlu0 %v833, 108
      %v919 = vpop.permute.xlu0 %918
      %v920 = vsel %vm366, %v913, %v915
      %v921 = vsel %vm366, %v915, %v917
      %v922 = vsel %vm366, %v917, %v919
      %926 = vrot.lane.b32.xlu0 %v826, 107
      %v927 = vpop.permute.xlu0 %926
      %928 = vrot.lane.b32.xlu0 %v827, 107
      %v929 = vpop.permute.xlu0 %928
      %930 = vrot.lane.b32.xlu0 %v828, 107
      %v931 = vpop.permute.xlu0 %930
      %932 = vrot.lane.b32.xlu0 %v829, 107
      %v933 = vpop.permute.xlu0 %932
      %v934 = vsel %vm403, %v927, %v929
      %v935 = vsel %vm403, %v929, %v931
      %v936 = vsel %vm403, %v931, %v933
      %940 = vrot.lane.b32.xlu0 %v830, 107
      %v941 = vpop.permute.xlu0 %940
      %942 = vrot.lane.b32.xlu0 %v831, 107
      %v943 = vpop.permute.xlu0 %942
      %944 = vrot.lane.b32.xlu0 %v832, 107
      %v945 = vpop.permute.xlu0 %944
      %946 = vrot.lane.b32.xlu0 %v833, 107
      %v947 = vpop.permute.xlu0 %946
      %v948 = vsel %vm403, %v941, %v943
      %v949 = vsel %vm403, %v943, %v945
      %v950 = vsel %vm403, %v945, %v947
      %954 = vrot.lane.b32.xlu0 %v826, 106
      %v955 = vpop.permute.xlu0 %954
      %956 = vrot.lane.b32.xlu0 %v827, 106
      %v957 = vpop.permute.xlu0 %956
      %958 = vrot.lane.b32.xlu0 %v828, 106
      %v959 = vpop.permute.xlu0 %958
      %960 = vrot.lane.b32.xlu0 %v829, 106
      %v961 = vpop.permute.xlu0 %960
      %v962 = vsel %vm440, %v955, %v957
      %v963 = vsel %vm440, %v957, %v959
      %v964 = vsel %vm440, %v959, %v961
      %968 = vrot.lane.b32.xlu0 %v830, 106
      %v969 = vpop.permute.xlu0 %968
      %970 = vrot.lane.b32.xlu0 %v831, 106
      %v971 = vpop.permute.xlu0 %970
      %972 = vrot.lane.b32.xlu0 %v832, 106
      %v973 = vpop.permute.xlu0 %972
      %974 = vrot.lane.b32.xlu0 %v833, 106
      %v975 = vpop.permute.xlu0 %974
      %v976 = vsel %vm440, %v969, %v971
      %v977 = vsel %vm440, %v971, %v973
      %v978 = vsel %vm440, %v973, %v975
      %982 = vrot.lane.b32.xlu0 %v826, 88
      %v983 = vpop.permute.xlu0 %982
      %984 = vrot.lane.b32.xlu0 %v827, 88
      %v985 = vpop.permute.xlu0 %984
      %986 = vrot.lane.b32.xlu0 %v828, 88
      %v987 = vpop.permute.xlu0 %986
      %988 = vrot.lane.b32.xlu0 %v829, 88
      %v989 = vpop.permute.xlu0 %988
      %v990 = vsel %vm477, %v983, %v985
      %v991 = vsel %vm477, %v985, %v987
      %v992 = vsel %vm477, %v987, %v989
      %996 = vrot.lane.b32.xlu0 %v830, 88
      %v997 = vpop.permute.xlu0 %996
      %998 = vrot.lane.b32.xlu0 %v831, 88
      %v999 = vpop.permute.xlu0 %998
      %1000 = vrot.lane.b32.xlu0 %v832, 88
      %v1001 = vpop.permute.xlu0 %1000
      %1002 = vrot.lane.b32.xlu0 %v833, 88
      %v1003 = vpop.permute.xlu0 %1002
      %v1004 = vsel %vm477, %v997, %v999
      %v1005 = vsel %vm477, %v999, %v1001
      %v1006 = vsel %vm477, %v1001, %v1003
      %1010 = vrot.lane.b32.xlu0 %v826, 87
      %v1011 = vpop.permute.xlu0 %1010
      %1012 = vrot.lane.b32.xlu0 %v827, 87
      %v1013 = vpop.permute.xlu0 %1012
      %1014 = vrot.lane.b32.xlu0 %v828, 87
      %v1015 = vpop.permute.xlu0 %1014
      %1016 = vrot.lane.b32.xlu0 %v829, 87
      %v1017 = vpop.permute.xlu0 %1016
      %v1018 = vsel %vm514, %v1011, %v1013
      %v1019 = vsel %vm514, %v1013, %v1015
      %v1020 = vsel %vm514, %v1015, %v1017
      %1024 = vrot.lane.b32.xlu0 %v830, 87
      %v1025 = vpop.permute.xlu0 %1024
      %1026 = vrot.lane.b32.xlu0 %v831, 87
      %v1027 = vpop.permute.xlu0 %1026
      %1028 = vrot.lane.b32.xlu0 %v832, 87
      %v1029 = vpop.permute.xlu0 %1028
      %1030 = vrot.lane.b32.xlu0 %v833, 87
      %v1031 = vpop.permute.xlu0 %1030
      %v1032 = vsel %vm514, %v1025, %v1027
      %v1033 = vsel %vm514, %v1027, %v1029
      %v1034 = vsel %vm514, %v1029, %v1031
      %1038 = vrot.lane.b32.xlu0 %v826, 86
      %v1039 = vpop.permute.xlu0 %1038
      %1040 = vrot.lane.b32.xlu0 %v827, 86
      %v1041 = vpop.permute.xlu0 %1040
      %1042 = vrot.lane.b32.xlu0 %v828, 86
      %v1043 = vpop.permute.xlu0 %1042
      %1044 = vrot.lane.b32.xlu0 %v829, 86
      %v1045 = vpop.permute.xlu0 %1044
      %v1046 = vsel %vm551, %v1039, %v1041
      %v1047 = vsel %vm551, %v1041, %v1043
      %v1048 = vsel %vm551, %v1043, %v1045
      %1052 = vrot.lane.b32.xlu0 %v830, 86
      %v1053 = vpop.permute.xlu0 %1052
      %1054 = vrot.lane.b32.xlu0 %v831, 86
      %v1055 = vpop.permute.xlu0 %1054
      %1056 = vrot.lane.b32.xlu0 %v832, 86
      %v1057 = vpop.permute.xlu0 %1056
      %1058 = vrot.lane.b32.xlu0 %v833, 86
      %v1059 = vpop.permute.xlu0 %1058
      %v1060 = vsel %vm551, %v1053, %v1055
      %v1061 = vsel %vm551, %v1055, %v1057
      %v1062 = vsel %vm551, %v1057, %v1059
      %v1066 = vld [vmem:[%s3] sm:$0x3]
      %v1067 = vpack.c.bf16 %v846, %v826
      %v1068 = vpack.c.bf16 %v847, %v827
      %v1069 = vpack.c.bf16 %v848, %v828
      %v1070 = vpack.c.bf16 %v864, %v830
      %v1071 = vpack.c.bf16 %v865, %v831
      %v1072 = vpack.c.bf16 %v866, %v832
      %v1073 = vpack.c.bf16 %v906, %v878
      %v1074 = vpack.c.bf16 %v907, %v879
      %v1075 = vpack.c.bf16 %v908, %v880
      %v1076 = vpack.c.bf16 %v920, %v892
      %v1077 = vpack.c.bf16 %v921, %v893
      %v1078 = vpack.c.bf16 %v922, %v894
      %v1079 = vpack.c.bf16 %v962, %v934
      %v1080 = vpack.c.bf16 %v963, %v935
      %v1081 = vpack.c.bf16 %v964, %v936
      %v1082 = vpack.c.bf16 %v976, %v948
      %v1083 = vpack.c.bf16 %v977, %v949
      %v1084 = vpack.c.bf16 %v978, %v950
      %v1085 = vpack.c.bf16 %v1018, %v990
      %v1086 = vpack.c.bf16 %v1019, %v991
      %v1087 = vpack.c.bf16 %v1020, %v992
      %v1088 = vpack.c.bf16 %v1032, %v1004
      %v1089 = vpack.c.bf16 %v1033, %v1005
      %v1090 = vpack.c.bf16 %v1034, %v1006
      %v1091 = vpack.c.bf16 %v1046, %v1046
      %v1092 = vpack.c.bf16 %v1047, %v1047
      %v1093 = vpack.c.bf16 %v1048, %v1048
      %v1094 = vpack.c.bf16 %v1060, %v1060
      %v1095 = vpack.c.bf16 %v1061, %v1061
      %v1096 = vpack.c.bf16 %v1062, %v1062
      %v1097 = vld [vmem:[%s4] sm:$0xf]
      %1099 = vset.pattern.permute.xlu0 0
      %1100 = vperm.xlu0 %1099, %v1097
      %v1101 = vpop.permute.xlu0 %1100
      %v1104 = vsel %vm625, %v1066, 0
      %v1107 = vsel %vm629, %v1091, 0
      %v1110 = vsel %vm629, %v1092, 0
      %v1113 = vsel %vm629, %v1093, 0
      %v1116 = vsel %vm629, %v1094, 0
      %v1119 = vsel %vm629, %v1095, 0
      %v1122 = vsel %vm629, %v1096, 0
      %1124 = vmatprep.subr.bf16.mxu0 0
      %1125 = vmatpush1.bf16.msra.mxu0 0
      %1126 = vmatprep.subr.bf16.mxu0 0
      %1127 = vmatpush1.bf16.msra.mxu0 0
      %1128 = vmatprep.subr.bf16.mxu0 0
      %1129 = vmatpush1.bf16.msra.mxu0 0
      %1130 = vmatprep.subr.bf16.mxu0 %v1110
      %1131 = vmatpush1.bf16.msra.mxu0 %v1107
      %1132 = vmatprep.subr.bf16.mxu0 %v1086
      %1133 = vmatpush1.bf16.msra.mxu0 %v1085
      %1134 = vmatprep.subr.bf16.mxu0 %v1080
      %1135 = vmatpush1.bf16.msra.mxu0 %v1079
      %1136 = vmatprep.subr.bf16.mxu0 %v1074
      %1137 = vmatpush1.bf16.msra.mxu0 %v1073
      %1138 = vmatprep.subr.bf16.mxu0 %v1068
      %1139 = vmatpush1.bf16.msra.mxu0 %v1067
      %1140 = vmatprep.subr.bf16.mxu0 0
      %1141 = vmatpush2.bf16.msra.mxu0 0
      %1142 = vmatprep.subr.bf16.mxu0 0
      %1143 = vmatpush2.bf16.msra.mxu0 0
      %1144 = vmatprep.subr.bf16.mxu0 0
      %1145 = vmatpush2.bf16.msra.mxu0 0
      %1146 = vmatprep.subr.bf16.mxu0 0
      %1147 = vmatpush2.bf16.msra.mxu0 0
      %1148 = vmatprep.subr.bf16.mxu0 0
      %1149 = vmatpush2.bf16.msra.mxu0 0
      %1150 = vmatprep.subr.bf16.mxu0 0
      %1151 = vmatpush2.bf16.msra.mxu0 0
      %1152 = vmatprep.subr.bf16.mxu0 0
      %1153 = vmatpush2.bf16.msra.mxu0 0
      %1154 = vmatprep.subr.bf16.mxu0 0
      %1155 = vmatpush2.bf16.msra.mxu0 0
      %1156 = vmatprep.mubr.bf16.mxu0 0
      %1157 = vmatmul.mubr.bf16.gmra.mxu0 %v1104
      %v1158 = vpop.f32.mrf.mxu0
      %v1159 = vadd.f32 %v1101, %v1158
      %v1160 = vpop.f32.mrf.mxu0
      %v1161 = vadd.f32 %v1101, %v1160
      %v1162 = vpop.f32.mrf.mxu0
      %v1163 = vpop.f32.mrf.mxu0
      %1164 = vdwg.mxu0
      %1165 = vmatprep.subr.bf16.mxu0 0
      %1166 = vmatpush1.bf16.msra.mxu0 0
      %1167 = vmatprep.subr.bf16.mxu0 0
      %1168 = vmatpush1.bf16.msra.mxu0 0
      %1169 = vmatprep.subr.bf16.mxu0 0
      %1170 = vmatpush1.bf16.msra.mxu0 0
      %1171 = vmatprep.subr.bf16.mxu0 %v1116
      %1172 = vmatpush1.bf16.msra.mxu0 %v1113
      %1173 = vmatprep.subr.bf16.mxu0 %v1088
      %1174 = vmatpush1.bf16.msra.mxu0 %v1087
      %1175 = vmatprep.subr.bf16.mxu0 %v1082
      %1176 = vmatpush1.bf16.msra.mxu0 %v1081
      %1177 = vmatprep.subr.bf16.mxu0 %v1076
      %1178 = vmatpush1.bf16.msra.mxu0 %v1075
      %1179 = vmatprep.subr.bf16.mxu0 %v1070
      %1180 = vmatpush1.bf16.msra.mxu0 %v1069
      %1181 = vmatprep.subr.bf16.mxu0 0
      %1182 = vmatpush2.bf16.msra.mxu0 0
      %1183 = vmatprep.subr.bf16.mxu0 0
      %1184 = vmatpush2.bf16.msra.mxu0 0
      %1185 = vmatprep.subr.bf16.mxu0 0
      %1186 = vmatpush2.bf16.msra.mxu0 0
      %1187 = vmatprep.subr.bf16.mxu0 0
      %1188 = vmatpush2.bf16.msra.mxu0 0
      %1189 = vmatprep.subr.bf16.mxu0 0
      %1190 = vmatpush2.bf16.msra.mxu0 0
      %1191 = vmatprep.subr.bf16.mxu0 0
      %1192 = vmatpush2.bf16.msra.mxu0 0
      %1193 = vmatprep.subr.bf16.mxu0 0
      %1194 = vmatpush2.bf16.msra.mxu0 0
      %1195 = vmatprep.subr.bf16.mxu0 0
      %1196 = vmatpush2.bf16.msra.mxu0 0
      %1197 = vmatprep.mubr.bf16.mxu0 0
      %1198 = vmatmul.mubr.bf16.gmra.mxu0 %v1104
      %v1199 = vpop.f32.mrf.mxu0
      %v1200 = vadd.f32 %v1101, %v1199
      %v1201 = vpop.f32.mrf.mxu0
      %v1202 = vadd.f32 %v1101, %v1201
      %v1203 = vpop.f32.mrf.mxu0
      %v1204 = vpop.f32.mrf.mxu0
      %1205 = vdwg.mxu0
      %1206 = vmatprep.subr.bf16.mxu0 0
      %1207 = vmatpush1.bf16.msra.mxu0 0
      %1208 = vmatprep.subr.bf16.mxu0 0
      %1209 = vmatpush1.bf16.msra.mxu0 0
      %1210 = vmatprep.subr.bf16.mxu0 0
      %1211 = vmatpush1.bf16.msra.mxu0 0
      %1212 = vmatprep.subr.bf16.mxu0 %v1122
      %1213 = vmatpush1.bf16.msra.mxu0 %v1119
      %1214 = vmatprep.subr.bf16.mxu0 %v1090
      %1215 = vmatpush1.bf16.msra.mxu0 %v1089
      %1216 = vmatprep.subr.bf16.mxu0 %v1084
      %1217 = vmatpush1.bf16.msra.mxu0 %v1083
      %1218 = vmatprep.subr.bf16.mxu0 %v1078
      %1219 = vmatpush1.bf16.msra.mxu0 %v1077
      %1220 = vmatprep.subr.bf16.mxu0 %v1072
      %1221 = vmatpush1.bf16.msra.mxu0 %v1071
      %1222 = vmatprep.subr.bf16.mxu0 0
      %1223 = vmatpush2.bf16.msra.mxu0 0
      %1224 = vmatprep.subr.bf16.mxu0 0
      %1225 = vmatpush2.bf16.msra.mxu0 0
      %1226 = vmatprep.subr.bf16.mxu0 0
      %1227 = vmatpush2.bf16.msra.mxu0 0
      %1228 = vmatprep.subr.bf16.mxu0 0
      %1229 = vmatpush2.bf16.msra.mxu0 0
      %1230 = vmatprep.subr.bf16.mxu0 0
      %1231 = vmatpush2.bf16.msra.mxu0 0
      %1232 = vmatprep.subr.bf16.mxu0 0
      %1233 = vmatpush2.bf16.msra.mxu0 0
      %1234 = vmatprep.subr.bf16.mxu0 0
      %1235 = vmatpush2.bf16.msra.mxu0 0
      %1236 = vmatprep.subr.bf16.mxu0 0
      %1237 = vmatpush2.bf16.msra.mxu0 0
      %1238 = vmatprep.mubr.bf16.mxu0 0
      %1239 = vmatmul.mubr.bf16.gmra.mxu0 %v1104
      %v1240 = vpop.f32.mrf.mxu0
      %v1241 = vadd.f32 %v1101, %v1240
      %v1242 = vpop.f32.mrf.mxu0
      %v1243 = vadd.f32 %v1101, %v1242
      %v1244 = vpop.f32.mrf.mxu0
      %v1245 = vpop.f32.mrf.mxu0
      %1246 = vdwg.mxu0
      %v1249 = vcombine.low %v1159, %v1161
      %1251 = vst [vmem:[%s258] sm:$0xff] %v1249
      %1252 = vst [vmem:[%s258 + $0x8] sm:$0xf] %v1200
      %v1255 = vcombine.low %v1202, %v1241
      %s1257 = scalar_lea.vmem %s258, 12
      %1258 = vst [vmem:[%s1257] sm:$0xff] %v1255
      %1259 = vst [vmem:[%s1257 + $0x8] sm:$0xf] %v1243
      %s1260 = smul.u32 2, %s17
      %p1261 = scmp.lt.s32.totalorder %s1260, 3
      %s1262 = scalar_select %p1261, %s1260, 3
      %s1263 = smul.addr %s1262, 3
      %s1264 = smul.addr %s1263, 4
      %s1265 = scalar_lea.vmem %s6, %s1264
      // Predicated region
      $region45: #{concat64_2_forward.1} parent=43 // pred_check
        %p1266 = pneg %p166
      $region46: #{concat64_2_forward.1} parent=43 // pred_check_branch
        %1268 = sbr.rel (%p1266) target = $region48
      $region47: #{concat64_2_forward.1} parent=43 // pred_region
        %s1269 = smul.u32 2, %s17
      $region48: #{concat64_2_forward.1} parent=43 // pred_fallthru
        _
    $region44: #{concat64_2_forward.1} parent=5 // pred_fallthru
      _
    %p1270 = scmp.le.s32.totalorder 2, %s12
    // Predicated region
    $region49: #{concat64_2_forward.1} parent=5 // pred_check
      %p1271 = pneg %p1270
    $region50: #{concat64_2_forward.1} parent=5 // pred_check_branch
      %1273 = sbr.rel (%p1271) target = $region52
    $region51: #{concat64_2_forward.1} parent=5 // pred_region
      %s1274 = ssub.s32 %s12, 2
      // Predicated region
      $region53: #{concat64_2_forward.1} parent=51 // pred_check
        %p1275 = pneg %p172
      $region54: #{concat64_2_forward.1} parent=51 // pred_check_branch
        %1277 = sbr.rel (%p1275) target = $region56
      $region55: #{concat64_2_forward.1} parent=51 // pred_region
        %s1278 = smul.u32 2, %s18
        %p1279 = scmp.lt.s32.totalorder %s1278, 3
        %s1280 = scalar_select %p1279, %s1278, 3
        %s1281 = smul.addr %s1280, 3
        %s1282 = smul.addr %s1281, 4
        %s1283 = scalar_lea.vmem %s6, %s1282
      $region56: #{concat64_2_forward.1} parent=51 // pred_fallthru
        _
    $region52: #{concat64_2_forward.1} parent=5 // pred_fallthru
      _
  $region6: #{concat64_2_forward.1} parent=0 // loop_footer
    %s16 = sadd.s32 1, %s12
  $region7: #{concat64_2_forward.1} parent=0 // loop_footer_branch
    %11 = sbr.rel target = $region3
  $region8: #{concat64_2_forward.1} parent=0 // loop_exit
    _

</llo_original>
